<compile_context>
chip_gen: v6e
topology: v6e:2x2x1
jax: 0.10.0
libtpu: 0.0.40
codegen_flags: <defaults>
</compile_context>

<pallas_src>
import math
import functools

import jax
import jax.numpy as jnp
from jax import lax
from jax.experimental import pallas as pl
from jax.experimental.pallas import tpu as pltpu

MXU_DTYPE = jnp.bfloat16   # MXU operand dtype; accumulation stays f32.


# ----------------------------------------------------------------------------
# One-time table / permutation builders (outside the kernel)
# ----------------------------------------------------------------------------
def make_rope_tables(num_heads, head_size, max_seq_len, dtype=jnp.float32):
    """cos/sin tables of shape (max_seq_len, C) laid out to match the per-head
    rotate-half column permutation applied to the q/k projection weights."""
    C = num_heads * head_size
    half = C // 2
    theta = 10000.0 ** (-2.0 * jnp.arange(half, dtype=jnp.float32) / C)      # (C/2,)
    position = jnp.arange(max_seq_len, dtype=jnp.float32)
    angles = position[:, None] * theta[None, :]                              # (Tmax, C/2)

    def to_head_layout(tab):  # (Tmax, C/2) -> (Tmax, C), duplicated across the two halves of each head
        t = tab.reshape(max_seq_len, num_heads, 1, head_size // 2)
        return jnp.repeat(t, 2, axis=2).reshape(max_seq_len, C)

    return (to_head_layout(jnp.cos(angles)).astype(dtype),
            to_head_layout(jnp.sin(angles)).astype(dtype))


def make_qk_column_perm(num_heads, head_size):
    """Permutation of the C q (or k) output columns: within each head, the even
    (pair-first) columns come first, then the odd (pair-second) columns."""
    hs = head_size
    within = jnp.concatenate([jnp.arange(0, hs, 2), jnp.arange(1, hs, 2)])
    return (jnp.arange(num_heads)[:, None] * hs + within[None, :]).reshape(-1)


# ----------------------------------------------------------------------------
# Fused kernel: LoRA-qkv + RoPE(q,k) + causal attention + output projection
# ----------------------------------------------------------------------------
def make_mha_kernel(num_heads, head_size, alpha):
    scale = 1.0 / math.sqrt(head_size)
    hs = head_size
    use_roll = (hs % 128 == 0)     # lane-aligned -> XLU roll; otherwise static-slice swap

    def rotate_half(t):            # t: (T, hs) f32 in [evens ; odds] layout -> [-odds ; evens]
        if use_roll:
            sign = jnp.where(
                lax.broadcasted_iota(jnp.int32, (1, hs), 1) < hs // 2,
                jnp.float32(-1.0), jnp.float32(1.0))
            return pltpu.roll(t, shift=hs // 2, axis=1) * sign
        return jnp.concatenate([-t[:, hs // 2:], t[:, :hs // 2]], axis=-1)

    def kernel(x_ref, cos_ref, sin_ref, wqkv_ref, bqkv_ref, a_ref, blora_ref,
               wp_ref, bp_ref, o_ref, ctx_ref):
        x = x_ref[0]                                   # (T, C) bf16
        T, C = x.shape

        # Fused qkv projection: bf16 operands on the MXU, f32 accumulation.
        xa = jnp.dot(x, a_ref[...], preferred_element_type=jnp.float32)       # (T, r)
        qkv = jnp.dot(x, wqkv_ref[...], preferred_element_type=jnp.float32)   # (T, 3C)
        qkv = qkv + alpha * jnp.dot(xa.astype(MXU_DTYPE), blora_ref[...],
                                    preferred_element_type=jnp.float32)
        qkv = qkv + bqkv_ref[...]                      # (1, 3C) f32 bias broadcasts
        # NOTE: LoRA dropout / attention dropout are identity (module default p = 0.0).

        q = qkv[:, :C]
        k = qkv[:, C:2 * C]
        v = qkv[:, 2 * C:]

        row = lax.broadcasted_iota(jnp.int32, (T, T), 0)
        col = lax.broadcasted_iota(jnp.int32, (T, T), 1)
        causal = row >= col

        # Per-head RoPE + causal softmax attention; results go to the VMEM ctx scratch.
        for h in range(num_heads):
            lo = h * hs
            hi = lo + hs
            cos_h = cos_ref[:, lo:hi]                  # (T, hs) f32
            sin_h = sin_ref[:, lo:hi]
            qh = q[:, lo:hi]
            kh = k[:, lo:hi]
            vh = v[:, lo:hi]
            qh = qh * cos_h + rotate_half(qh) * sin_h  # RoPE in f32, no matmul
            kh = kh * cos_h + rotate_half(kh) * sin_h

            s = lax.dot_general(qh.astype(MXU_DTYPE), kh.astype(MXU_DTYPE),
                                (((1,), (1,)), ((), ())),
                                preferred_element_type=jnp.float32) * scale
            s = jnp.where(causal, s, jnp.float32(-1e30))
            m = jnp.max(s, axis=-1, keepdims=True)
            e = jnp.exp(s - m)
            l = jnp.sum(e, axis=-1, keepdims=True)
            p = e * pl.reciprocal(l, approx=True)
            ctx_ref[:, lo:hi] = jnp.dot(p.astype(MXU_DTYPE), vh.astype(MXU_DTYPE),
                                        preferred_element_type=jnp.float32)

        out = jnp.dot(ctx_ref[...].astype(MXU_DTYPE), wp_ref[...],
                      preferred_element_type=jnp.float32) + bp_ref[...]
        o_ref[0] = out.astype(o_ref.dtype)

    return kernel


# ----------------------------------------------------------------------------
# Wrapper
# ----------------------------------------------------------------------------
def multi_head_attention(x, W_attn, b_attn, A_lora, B_lora, W_proj, b_proj, *,
                         num_heads, context_size, alpha):
    """x: (B, T, C). W_attn: (C, 3C) (= torch weight.T), b_attn: (3C,),
    A_lora: (C, r), B_lora: (r, 3C), W_proj: (C, C) (= torch weight.T), b_proj: (C,)."""
    B, T, C = x.shape
    assert C % num_heads == 0
    hs = C // num_heads
    assert hs % 2 == 0, "head_size must be even for RoPE"
    rank = A_lora.shape[1]

    # One-time layout plumbing (no extra HBM activation traffic at run time).
    cos_tab, sin_tab = make_rope_tables(num_heads, hs, context_size, jnp.float32)
    cos = cos_tab[:T]                                  # (T, C)
    sin = sin_tab[:T]

    perm = make_qk_column_perm(num_heads, hs)                               # (C,)
    col_perm = jnp.concatenate([perm, C + perm, 2 * C + jnp.arange(C)])     # (3C,)

    wqkv = W_attn[:, col_perm].astype(MXU_DTYPE)                 # (C, 3C) bf16
    bqkv = b_attn[col_perm].reshape(1, 3 * C).astype(jnp.float32)
    a_lora = A_lora.astype(MXU_DTYPE)                            # (C, r)
    blora = B_lora[:, col_perm].astype(MXU_DTYPE)                # (r, 3C)
    wp = W_proj.astype(MXU_DTYPE)                                # (C, C)
    bp = b_proj.reshape(1, C).astype(jnp.float32)
    x_in = x.astype(MXU_DTYPE)

    kernel = make_mha_kernel(num_heads, hs, float(alpha))

    resident = lambda shape: pl.BlockSpec(shape, lambda b, _s=shape: (0,) * len(_s))  # noqa: E731

    operands = (x_in, cos, sin, wqkv, bqkv, a_lora, blora, wp, bp)
    resident_bytes = sum(int(a.size) * a.dtype.itemsize for a in operands[1:])
    block_bytes = T * C * (x_in.dtype.itemsize + x.dtype.itemsize)   # x block + out block
    vmem_limit = int(min(100 * 2**20,
                         max(2 * (resident_bytes + block_bytes) + T * C * 4 + (4 << 20),
                             32 << 20)))

    out = pl.pallas_call(
        kernel,
        out_shape=jax.ShapeDtypeStruct((B, T, C), x.dtype),
        grid=(B,),
        in_specs=[
            pl.BlockSpec((1, T, C), lambda b: (b, 0, 0)),   # x
            resident((T, C)),                               # cos (rotate-half layout)
            resident((T, C)),                               # sin
            resident((C, 3 * C)),                           # fused qkv weight (q/k cols permuted)
            resident((1, 3 * C)),                           # fused qkv bias
            resident((C, rank)),                            # LoRA A (shared)
            resident((rank, 3 * C)),                        # LoRA B (q/k cols permuted)
            resident((C, C)),                               # W_proj
            resident((1, C)),                               # b_proj
        ],
        out_specs=pl.BlockSpec((1, T, C), lambda b: (b, 0, 0)),
        scratch_shapes=[pltpu.VMEM((T, C), jnp.float32)],   # per-head ctx buffer
        compiler_params=pltpu.CompilerParams(
            dimension_semantics=("parallel",),
            vmem_limit_bytes=vmem_limit),
    )(*operands)
    return out


# ----------------------------------------------------------------------------
# Pure-JAX reference (mirrors the PyTorch forward, eval mode, pad_mask=None)
# ----------------------------------------------------------------------------
def mha_reference(x, W_attn, b_attn, A_lora, B_lora, W_proj, b_proj, *,
                  num_heads, context_size, alpha):
    B, T, C = x.shape
    half = C // 2
    hs = C // num_heads

    qkv = x @ W_attn + b_attn + alpha * ((x @ A_lora) @ B_lora)
    q, k, v = jnp.split(qkv, 3, axis=-1)

    theta = 10000.0 ** (-2.0 * jnp.arange(half, dtype=jnp.float32) / C)
    pos = jnp.arange(T, dtype=jnp.float32)
    ang = pos[:, None] * theta[None, :]
    cos = jnp.cos(ang)[None, :, :, None]
    sin = jnp.sin(ang)[None, :, :, None]

    def rope(t):
        tr = t.reshape(B, T, half, 2)
        t_rot = jnp.concatenate([-tr[..., 1:2], tr[..., 0:1]], axis=-1)
        return (tr * cos + t_rot * sin).reshape(B, T, C)

    q = rope(q)
    k = rope(k)

    qh = q.reshape(B, T, num_heads, hs).transpose(0, 2, 1, 3)
    kh = k.reshape(B, T, num_heads, hs).transpose(0, 2, 1, 3)
    vh = v.reshape(B, T, num_heads, hs).transpose(0, 2, 1, 3)

    s = jnp.einsum('bhqd,bhkd->bhqk', qh, kh) / jnp.sqrt(jnp.float32(hs))
    mask = jnp.tril(jnp.ones((T, T), dtype=bool))
    s = jnp.where(mask[None, None], s, -jnp.inf)
    p = jax.nn.softmax(s, axis=-1)
    ctx = jnp.einsum('bhqk,bhkd->bhqd', p, vh)
    ctx = ctx.transpose(0, 2, 1, 3).reshape(B, T, C)
    return ctx @ W_proj + b_proj


if __name__ == "__main__":
    # Small shapes consistent with the module: batch=2, seq=8, embedding_dim=32,
    # num_heads=4 (head_size=8), context_size=16, lora_rank=8, lora_alpha=2.0.
    B, T, C = 2, 8, 32
    num_heads = 4
    context_size = 16
    rank = 8
    alpha = 2.0

    key = jax.random.PRNGKey(0)
    ks = jax.random.split(key, 7)
    x = jax.random.normal(ks[0], (B, T, C), dtype=jnp.float32)
    W_attn = jax.random.normal(ks[1], (C, 3 * C), dtype=jnp.float32) * 0.05
    b_attn = jax.random.normal(ks[2], (3 * C,), dtype=jnp.float32) * 0.02
    A_lora = jax.random.normal(ks[3], (C, rank), dtype=jnp.float32) / math.sqrt(rank)
    # (PyTorch inits B to zeros; use nonzero values so the LoRA path is actually exercised.)
    B_lora = jax.random.normal(ks[4], (rank, 3 * C), dtype=jnp.float32) * 0.05
    W_proj = jax.random.normal(ks[5], (C, C), dtype=jnp.float32) * 0.05
    b_proj = jax.random.normal(ks[6], (C,), dtype=jnp.float32) * 0.02

    fn = functools.partial(multi_head_attention, num_heads=num_heads,
                           context_size=context_size, alpha=alpha)
    out = fn(x, W_attn, b_attn, A_lora, B_lora, W_proj, b_proj)
    out = jax.block_until_ready(out)

    ref = mha_reference(x, W_attn, b_attn, A_lora, B_lora, W_proj, b_proj,
                        num_heads=num_heads, context_size=context_size, alpha=alpha)

    assert out.shape == (B, T, C)
    # bf16 MXU operands vs. the f32 reference -> widened tolerance.
    assert jnp.allclose(out, ref, atol=2e-2, rtol=2e-2), (
        f"max abs err = {jnp.max(jnp.abs(out - ref))}")

    print("KERNEL_OK")
</pallas_src>

<mosaic_0001>
module attributes {stable_mosaic.version = 11 : i64} {
  func.func @kernel(%arg0: i32, %arg1: memref<1x8x32xbf16, #tpu.memory_space<vmem>>, %arg2: memref<8x32xf32, #tpu.memory_space<vmem>>, %arg3: memref<8x32xf32, #tpu.memory_space<vmem>>, %arg4: memref<32x96xbf16, #tpu.memory_space<vmem>>, %arg5: memref<1x96xf32, #tpu.memory_space<vmem>>, %arg6: memref<32x8xbf16, #tpu.memory_space<vmem>>, %arg7: memref<8x96xbf16, #tpu.memory_space<vmem>>, %arg8: memref<32x32xbf16, #tpu.memory_space<vmem>>, %arg9: memref<1x32xf32, #tpu.memory_space<vmem>>, %arg10: memref<1x8x32xf32, #tpu.memory_space<vmem>>, %arg11: memref<8x32xf32, #tpu.memory_space<vmem>>) attributes {dimension_semantics = [#tpu.dimension_semantics<parallel>], iteration_bounds = array<i64: 2>, scalar_prefetch = 0 : i64, scratch_operands = 1 : i64, tpu.core_type = #tpu.core_type<tc>, window_params = [{transform_indices = @transform_0, window_bounds = array<i64: 1, 8, 32>}, {pipeline_mode = #tpu.pipeline_mode<synchronous>, transform_indices = @transform_1, window_bounds = array<i64: 8, 32>}, {pipeline_mode = #tpu.pipeline_mode<synchronous>, transform_indices = @transform_2, window_bounds = array<i64: 8, 32>}, {pipeline_mode = #tpu.pipeline_mode<synchronous>, transform_indices = @transform_3, window_bounds = array<i64: 32, 96>}, {pipeline_mode = #tpu.pipeline_mode<synchronous>, transform_indices = @transform_4, window_bounds = array<i64: 1, 96>}, {pipeline_mode = #tpu.pipeline_mode<synchronous>, transform_indices = @transform_5, window_bounds = array<i64: 32, 8>}, {pipeline_mode = #tpu.pipeline_mode<synchronous>, transform_indices = @transform_6, window_bounds = array<i64: 8, 96>}, {pipeline_mode = #tpu.pipeline_mode<synchronous>, transform_indices = @transform_7, window_bounds = array<i64: 32, 32>}, {pipeline_mode = #tpu.pipeline_mode<synchronous>, transform_indices = @transform_8, window_bounds = array<i64: 1, 32>}, {transform_indices = @transform_9, window_bounds = array<i64: 1, 8, 32>}]} {
    %c0 = arith.constant 0 : index
    %c0_0 = arith.constant 0 : index
    %c0_1 = arith.constant 0 : index
    %0 = vector.load %arg1[%c0, %c0_0, %c0_1] : memref<1x8x32xbf16, #tpu.memory_space<vmem>>, vector<1x8x32xbf16>
    %1 = vector.shape_cast %0 : vector<1x8x32xbf16> to vector<8x32xbf16>
    %c0_2 = arith.constant 0 : index
    %c0_3 = arith.constant 0 : index
    %2 = vector.load %arg6[%c0_2, %c0_3] : memref<32x8xbf16, #tpu.memory_space<vmem>>, vector<32x8xbf16>
    %cst = arith.constant dense<0.000000e+00> : vector<8x8xf32>
    %3 = tpu.matmul %1, %2, %cst {dimension_numbers = #tpu.dot_dimension_numbers<[1], [0], [0], [1], [0, 0, 1, 1], [], []>} : vector<8x32xbf16>, vector<32x8xbf16>, vector<8x8xf32> -> vector<8x8xf32>
    %c0_4 = arith.constant 0 : index
    %c0_5 = arith.constant 0 : index
    %4 = vector.load %arg4[%c0_4, %c0_5] : memref<32x96xbf16, #tpu.memory_space<vmem>>, vector<32x96xbf16>
    %cst_6 = arith.constant dense<0.000000e+00> : vector<8x96xf32>
    %5 = tpu.matmul %1, %4, %cst_6 {dimension_numbers = #tpu.dot_dimension_numbers<[1], [0], [0], [1], [0, 0, 1, 1], [], []>} : vector<8x32xbf16>, vector<32x96xbf16>, vector<8x96xf32> -> vector<8x96xf32>
    %6 = arith.truncf %3 : vector<8x8xf32> to vector<8x8xbf16>
    %c0_7 = arith.constant 0 : index
    %c0_8 = arith.constant 0 : index
    %7 = vector.load %arg7[%c0_7, %c0_8] : memref<8x96xbf16, #tpu.memory_space<vmem>>, vector<8x96xbf16>
    %cst_9 = arith.constant dense<0.000000e+00> : vector<8x96xf32>
    %8 = tpu.matmul %6, %7, %cst_9 {dimension_numbers = #tpu.dot_dimension_numbers<[1], [0], [0], [1], [0, 0, 1, 1], [], []>} : vector<8x8xbf16>, vector<8x96xbf16>, vector<8x96xf32> -> vector<8x96xf32>
    %cst_10 = arith.constant 2.000000e+00 : f32
    %9 = vector.broadcast %cst_10 : f32 to vector<8x96xf32>
    %10 = arith.mulf %9, %8 : vector<8x96xf32>
    %11 = arith.addf %5, %10 : vector<8x96xf32>
    %c0_11 = arith.constant 0 : index
    %c0_12 = arith.constant 0 : index
    %12 = vector.load %arg5[%c0_11, %c0_12] : memref<1x96xf32, #tpu.memory_space<vmem>>, vector<1x96xf32>
    %13 = vector.broadcast %12 : vector<1x96xf32> to vector<8x96xf32>
    %14 = arith.addf %11, %13 : vector<8x96xf32>
    %15 = vector.extract_strided_slice %14 {offsets = [0, 0], sizes = [8, 32], strides = [1, 1]} : vector<8x96xf32> to vector<8x32xf32>
    %16 = vector.extract_strided_slice %14 {offsets = [0, 32], sizes = [8, 32], strides = [1, 1]} : vector<8x96xf32> to vector<8x32xf32>
    %17 = vector.extract_strided_slice %14 {offsets = [0, 64], sizes = [8, 32], strides = [1, 1]} : vector<8x96xf32> to vector<8x32xf32>
    %18 = tpu.iota {dimensions = array<i32: 0>} : vector<8x8xi32>
    %19 = tpu.iota {dimensions = array<i32: 1>} : vector<8x8xi32>
    %20 = arith.cmpi sge, %18, %19 : vector<8x8xi32>
    %c0_13 = arith.constant 0 : index
    %c0_14 = arith.constant 0 : index
    %21 = vector.load %arg2[%c0_13, %c0_14] : memref<8x32xf32, #tpu.memory_space<vmem>>, vector<8x8xf32>
    %c0_15 = arith.constant 0 : index
    %c0_16 = arith.constant 0 : index
    %22 = vector.load %arg3[%c0_15, %c0_16] : memref<8x32xf32, #tpu.memory_space<vmem>>, vector<8x8xf32>
    %23 = vector.extract_strided_slice %15 {offsets = [0, 0], sizes = [8, 8], strides = [1, 1]} : vector<8x32xf32> to vector<8x8xf32>
    %24 = vector.extract_strided_slice %16 {offsets = [0, 0], sizes = [8, 8], strides = [1, 1]} : vector<8x32xf32> to vector<8x8xf32>
    %25 = vector.extract_strided_slice %17 {offsets = [0, 0], sizes = [8, 8], strides = [1, 1]} : vector<8x32xf32> to vector<8x8xf32>
    %26 = arith.mulf %23, %21 : vector<8x8xf32>
    %27 = vector.extract_strided_slice %23 {offsets = [0, 4], sizes = [8, 4], strides = [1, 1]} : vector<8x8xf32> to vector<8x4xf32>
    %cst_17 = arith.constant 0.000000e+00 : f32
    %28 = vector.broadcast %cst_17 : f32 to vector<8x4xf32>
    %29 = arith.subf %28, %27 : vector<8x4xf32>
    %30 = vector.extract_strided_slice %23 {offsets = [0, 0], sizes = [8, 4], strides = [1, 1]} : vector<8x8xf32> to vector<8x4xf32>
    %31 = tpu.concatenate %29, %30 in 1 : vector<8x4xf32>, vector<8x4xf32> -> vector<8x8xf32>
    %32 = arith.mulf %31, %22 : vector<8x8xf32>
    %33 = arith.addf %26, %32 : vector<8x8xf32>
    %34 = arith.mulf %24, %21 : vector<8x8xf32>
    %35 = vector.extract_strided_slice %24 {offsets = [0, 4], sizes = [8, 4], strides = [1, 1]} : vector<8x8xf32> to vector<8x4xf32>
    %cst_18 = arith.constant 0.000000e+00 : f32
    %36 = vector.broadcast %cst_18 : f32 to vector<8x4xf32>
    %37 = arith.subf %36, %35 : vector<8x4xf32>
    %38 = vector.extract_strided_slice %24 {offsets = [0, 0], sizes = [8, 4], strides = [1, 1]} : vector<8x8xf32> to vector<8x4xf32>
    %39 = tpu.concatenate %37, %38 in 1 : vector<8x4xf32>, vector<8x4xf32> -> vector<8x8xf32>
    %40 = arith.mulf %39, %22 : vector<8x8xf32>
    %41 = arith.addf %34, %40 : vector<8x8xf32>
    %42 = arith.truncf %33 : vector<8x8xf32> to vector<8x8xbf16>
    %43 = arith.truncf %41 : vector<8x8xf32> to vector<8x8xbf16>
    %cst_19 = arith.constant dense<0.000000e+00> : vector<8x8xf32>
    %44 = tpu.matmul %42, %43, %cst_19 {dimension_numbers = #tpu.dot_dimension_numbers<[1], [1], [0], [0], [0, 0, 1, 0], [], []>} : vector<8x8xbf16>, vector<8x8xbf16>, vector<8x8xf32> -> vector<8x8xf32>
    %cst_20 = arith.constant 0.353553385 : f32
    %45 = vector.broadcast %cst_20 : f32 to vector<8x8xf32>
    %46 = arith.mulf %44, %45 : vector<8x8xf32>
    %cst_21 = arith.constant -1.000000e+30 : f32
    %47 = vector.broadcast %cst_21 : f32 to vector<8x8xf32>
    %48 = arith.select %20, %46, %47 : vector<8x8xi1>, vector<8x8xf32>
    %cst_22 = arith.constant dense<0xFF800000> : vector<8xf32>
    %49 = vector.multi_reduction <maximumf>, %48, %cst_22 [1] : vector<8x8xf32> to vector<8xf32>
    %50 = vector.shape_cast %49 : vector<8xf32> to vector<8x1xf32>
    %51 = vector.broadcast %50 : vector<8x1xf32> to vector<8x8xf32>
    %52 = arith.subf %48, %51 : vector<8x8xf32>
    %53 = math.exp %52 : vector<8x8xf32>
    %cst_23 = arith.constant dense<0.000000e+00> : vector<8xf32>
    %54 = vector.multi_reduction <add>, %53, %cst_23 [1] : vector<8x8xf32> to vector<8xf32>
    %55 = vector.shape_cast %54 : vector<8xf32> to vector<8x1xf32>
    %56 = tpu.reciprocal %55 {approx = true} : vector<8x1xf32> -> vector<8x1xf32>
    %57 = vector.broadcast %56 : vector<8x1xf32> to vector<8x8xf32>
    %58 = arith.mulf %53, %57 : vector<8x8xf32>
    %59 = arith.truncf %58 : vector<8x8xf32> to vector<8x8xbf16>
    %60 = arith.truncf %25 : vector<8x8xf32> to vector<8x8xbf16>
    %cst_24 = arith.constant dense<0.000000e+00> : vector<8x8xf32>
    %61 = tpu.matmul %59, %60, %cst_24 {dimension_numbers = #tpu.dot_dimension_numbers<[1], [0], [0], [1], [0, 0, 1, 1], [], []>} : vector<8x8xbf16>, vector<8x8xbf16>, vector<8x8xf32> -> vector<8x8xf32>
    %c0_25 = arith.constant 0 : index
    %c0_26 = arith.constant 0 : index
    %62 = vector.load %arg11[%c0_25, %c0_26] : memref<8x32xf32, #tpu.memory_space<vmem>>, vector<8x8xf32>
    tpu.vector_store %arg11[%c0_25, %c0_26], %61 {strides = array<i32>} : memref<8x32xf32, #tpu.memory_space<vmem>>, vector<8x8xf32>,
    %c0_27 = arith.constant 0 : index
    %c8 = arith.constant 8 : index
    %63 = vector.load %arg2[%c0_27, %c8] : memref<8x32xf32, #tpu.memory_space<vmem>>, vector<8x8xf32>
    %c0_28 = arith.constant 0 : index
    %c8_29 = arith.constant 8 : index
    %64 = vector.load %arg3[%c0_28, %c8_29] : memref<8x32xf32, #tpu.memory_space<vmem>>, vector<8x8xf32>
    %65 = vector.extract_strided_slice %15 {offsets = [0, 8], sizes = [8, 8], strides = [1, 1]} : vector<8x32xf32> to vector<8x8xf32>
    %66 = vector.extract_strided_slice %16 {offsets = [0, 8], sizes = [8, 8], strides = [1, 1]} : vector<8x32xf32> to vector<8x8xf32>
    %67 = vector.extract_strided_slice %17 {offsets = [0, 8], sizes = [8, 8], strides = [1, 1]} : vector<8x32xf32> to vector<8x8xf32>
    %68 = arith.mulf %65, %63 : vector<8x8xf32>
    %69 = vector.extract_strided_slice %65 {offsets = [0, 4], sizes = [8, 4], strides = [1, 1]} : vector<8x8xf32> to vector<8x4xf32>
    %cst_30 = arith.constant 0.000000e+00 : f32
    %70 = vector.broadcast %cst_30 : f32 to vector<8x4xf32>
    %71 = arith.subf %70, %69 : vector<8x4xf32>
    %72 = vector.extract_strided_slice %65 {offsets = [0, 0], sizes = [8, 4], strides = [1, 1]} : vector<8x8xf32> to vector<8x4xf32>
    %73 = tpu.concatenate %71, %72 in 1 : vector<8x4xf32>, vector<8x4xf32> -> vector<8x8xf32>
    %74 = arith.mulf %73, %64 : vector<8x8xf32>
    %75 = arith.addf %68, %74 : vector<8x8xf32>
    %76 = arith.mulf %66, %63 : vector<8x8xf32>
    %77 = vector.extract_strided_slice %66 {offsets = [0, 4], sizes = [8, 4], strides = [1, 1]} : vector<8x8xf32> to vector<8x4xf32>
    %cst_31 = arith.constant 0.000000e+00 : f32
    %78 = vector.broadcast %cst_31 : f32 to vector<8x4xf32>
    %79 = arith.subf %78, %77 : vector<8x4xf32>
    %80 = vector.extract_strided_slice %66 {offsets = [0, 0], sizes = [8, 4], strides = [1, 1]} : vector<8x8xf32> to vector<8x4xf32>
    %81 = tpu.concatenate %79, %80 in 1 : vector<8x4xf32>, vector<8x4xf32> -> vector<8x8xf32>
    %82 = arith.mulf %81, %64 : vector<8x8xf32>
    %83 = arith.addf %76, %82 : vector<8x8xf32>
    %84 = arith.truncf %75 : vector<8x8xf32> to vector<8x8xbf16>
    %85 = arith.truncf %83 : vector<8x8xf32> to vector<8x8xbf16>
    %cst_32 = arith.constant dense<0.000000e+00> : vector<8x8xf32>
    %86 = tpu.matmul %84, %85, %cst_32 {dimension_numbers = #tpu.dot_dimension_numbers<[1], [1], [0], [0], [0, 0, 1, 0], [], []>} : vector<8x8xbf16>, vector<8x8xbf16>, vector<8x8xf32> -> vector<8x8xf32>
    %cst_33 = arith.constant 0.353553385 : f32
    %87 = vector.broadcast %cst_33 : f32 to vector<8x8xf32>
    %88 = arith.mulf %86, %87 : vector<8x8xf32>
    %cst_34 = arith.constant -1.000000e+30 : f32
    %89 = vector.broadcast %cst_34 : f32 to vector<8x8xf32>
    %90 = arith.select %20, %88, %89 : vector<8x8xi1>, vector<8x8xf32>
    %cst_35 = arith.constant dense<0xFF800000> : vector<8xf32>
    %91 = vector.multi_reduction <maximumf>, %90, %cst_35 [1] : vector<8x8xf32> to vector<8xf32>
    %92 = vector.shape_cast %91 : vector<8xf32> to vector<8x1xf32>
    %93 = vector.broadcast %92 : vector<8x1xf32> to vector<8x8xf32>
    %94 = arith.subf %90, %93 : vector<8x8xf32>
    %95 = math.exp %94 : vector<8x8xf32>
    %cst_36 = arith.constant dense<0.000000e+00> : vector<8xf32>
    %96 = vector.multi_reduction <add>, %95, %cst_36 [1] : vector<8x8xf32> to vector<8xf32>
    %97 = vector.shape_cast %96 : vector<8xf32> to vector<8x1xf32>
    %98 = tpu.reciprocal %97 {approx = true} : vector<8x1xf32> -> vector<8x1xf32>
    %99 = vector.broadcast %98 : vector<8x1xf32> to vector<8x8xf32>
    %100 = arith.mulf %95, %99 : vector<8x8xf32>
    %101 = arith.truncf %100 : vector<8x8xf32> to vector<8x8xbf16>
    %102 = arith.truncf %67 : vector<8x8xf32> to vector<8x8xbf16>
    %cst_37 = arith.constant dense<0.000000e+00> : vector<8x8xf32>
    %103 = tpu.matmul %101, %102, %cst_37 {dimension_numbers = #tpu.dot_dimension_numbers<[1], [0], [0], [1], [0, 0, 1, 1], [], []>} : vector<8x8xbf16>, vector<8x8xbf16>, vector<8x8xf32> -> vector<8x8xf32>
    %c0_38 = arith.constant 0 : index
    %c8_39 = arith.constant 8 : index
    %104 = vector.load %arg11[%c0_38, %c8_39] : memref<8x32xf32, #tpu.memory_space<vmem>>, vector<8x8xf32>
    tpu.vector_store %arg11[%c0_38, %c8_39], %103 {strides = array<i32>} : memref<8x32xf32, #tpu.memory_space<vmem>>, vector<8x8xf32>,
    %c0_40 = arith.constant 0 : index
    %c16 = arith.constant 16 : index
    %105 = vector.load %arg2[%c0_40, %c16] : memref<8x32xf32, #tpu.memory_space<vmem>>, vector<8x8xf32>
    %c0_41 = arith.constant 0 : index
    %c16_42 = arith.constant 16 : index
    %106 = vector.load %arg3[%c0_41, %c16_42] : memref<8x32xf32, #tpu.memory_space<vmem>>, vector<8x8xf32>
    %107 = vector.extract_strided_slice %15 {offsets = [0, 16], sizes = [8, 8], strides = [1, 1]} : vector<8x32xf32> to vector<8x8xf32>
    %108 = vector.extract_strided_slice %16 {offsets = [0, 16], sizes = [8, 8], strides = [1, 1]} : vector<8x32xf32> to vector<8x8xf32>
    %109 = vector.extract_strided_slice %17 {offsets = [0, 16], sizes = [8, 8], strides = [1, 1]} : vector<8x32xf32> to vector<8x8xf32>
    %110 = arith.mulf %107, %105 : vector<8x8xf32>
    %111 = vector.extract_strided_slice %107 {offsets = [0, 4], sizes = [8, 4], strides = [1, 1]} : vector<8x8xf32> to vector<8x4xf32>
    %cst_43 = arith.constant 0.000000e+00 : f32
    %112 = vector.broadcast %cst_43 : f32 to vector<8x4xf32>
    %113 = arith.subf %112, %111 : vector<8x4xf32>
    %114 = vector.extract_strided_slice %107 {offsets = [0, 0], sizes = [8, 4], strides = [1, 1]} : vector<8x8xf32> to vector<8x4xf32>
    %115 = tpu.concatenate %113, %114 in 1 : vector<8x4xf32>, vector<8x4xf32> -> vector<8x8xf32>
    %116 = arith.mulf %115, %106 : vector<8x8xf32>
    %117 = arith.addf %110, %116 : vector<8x8xf32>
    %118 = arith.mulf %108, %105 : vector<8x8xf32>
    %119 = vector.extract_strided_slice %108 {offsets = [0, 4], sizes = [8, 4], strides = [1, 1]} : vector<8x8xf32> to vector<8x4xf32>
    %cst_44 = arith.constant 0.000000e+00 : f32
    %120 = vector.broadcast %cst_44 : f32 to vector<8x4xf32>
    %121 = arith.subf %120, %119 : vector<8x4xf32>
    %122 = vector.extract_strided_slice %108 {offsets = [0, 0], sizes = [8, 4], strides = [1, 1]} : vector<8x8xf32> to vector<8x4xf32>
    %123 = tpu.concatenate %121, %122 in 1 : vector<8x4xf32>, vector<8x4xf32> -> vector<8x8xf32>
    %124 = arith.mulf %123, %106 : vector<8x8xf32>
    %125 = arith.addf %118, %124 : vector<8x8xf32>
    %126 = arith.truncf %117 : vector<8x8xf32> to vector<8x8xbf16>
    %127 = arith.truncf %125 : vector<8x8xf32> to vector<8x8xbf16>
    %cst_45 = arith.constant dense<0.000000e+00> : vector<8x8xf32>
    %128 = tpu.matmul %126, %127, %cst_45 {dimension_numbers = #tpu.dot_dimension_numbers<[1], [1], [0], [0], [0, 0, 1, 0], [], []>} : vector<8x8xbf16>, vector<8x8xbf16>, vector<8x8xf32> -> vector<8x8xf32>
    %cst_46 = arith.constant 0.353553385 : f32
    %129 = vector.broadcast %cst_46 : f32 to vector<8x8xf32>
    %130 = arith.mulf %128, %129 : vector<8x8xf32>
    %cst_47 = arith.constant -1.000000e+30 : f32
    %131 = vector.broadcast %cst_47 : f32 to vector<8x8xf32>
    %132 = arith.select %20, %130, %131 : vector<8x8xi1>, vector<8x8xf32>
    %cst_48 = arith.constant dense<0xFF800000> : vector<8xf32>
    %133 = vector.multi_reduction <maximumf>, %132, %cst_48 [1] : vector<8x8xf32> to vector<8xf32>
    %134 = vector.shape_cast %133 : vector<8xf32> to vector<8x1xf32>
    %135 = vector.broadcast %134 : vector<8x1xf32> to vector<8x8xf32>
    %136 = arith.subf %132, %135 : vector<8x8xf32>
    %137 = math.exp %136 : vector<8x8xf32>
    %cst_49 = arith.constant dense<0.000000e+00> : vector<8xf32>
    %138 = vector.multi_reduction <add>, %137, %cst_49 [1] : vector<8x8xf32> to vector<8xf32>
    %139 = vector.shape_cast %138 : vector<8xf32> to vector<8x1xf32>
    %140 = tpu.reciprocal %139 {approx = true} : vector<8x1xf32> -> vector<8x1xf32>
    %141 = vector.broadcast %140 : vector<8x1xf32> to vector<8x8xf32>
    %142 = arith.mulf %137, %141 : vector<8x8xf32>
    %143 = arith.truncf %142 : vector<8x8xf32> to vector<8x8xbf16>
    %144 = arith.truncf %109 : vector<8x8xf32> to vector<8x8xbf16>
    %cst_50 = arith.constant dense<0.000000e+00> : vector<8x8xf32>
    %145 = tpu.matmul %143, %144, %cst_50 {dimension_numbers = #tpu.dot_dimension_numbers<[1], [0], [0], [1], [0, 0, 1, 1], [], []>} : vector<8x8xbf16>, vector<8x8xbf16>, vector<8x8xf32> -> vector<8x8xf32>
    %c0_51 = arith.constant 0 : index
    %c16_52 = arith.constant 16 : index
    %146 = vector.load %arg11[%c0_51, %c16_52] : memref<8x32xf32, #tpu.memory_space<vmem>>, vector<8x8xf32>
    tpu.vector_store %arg11[%c0_51, %c16_52], %145 {strides = array<i32>} : memref<8x32xf32, #tpu.memory_space<vmem>>, vector<8x8xf32>,
    %c0_53 = arith.constant 0 : index
    %c24 = arith.constant 24 : index
    %147 = vector.load %arg2[%c0_53, %c24] : memref<8x32xf32, #tpu.memory_space<vmem>>, vector<8x8xf32>
    %c0_54 = arith.constant 0 : index
    %c24_55 = arith.constant 24 : index
    %148 = vector.load %arg3[%c0_54, %c24_55] : memref<8x32xf32, #tpu.memory_space<vmem>>, vector<8x8xf32>
    %149 = vector.extract_strided_slice %15 {offsets = [0, 24], sizes = [8, 8], strides = [1, 1]} : vector<8x32xf32> to vector<8x8xf32>
    %150 = vector.extract_strided_slice %16 {offsets = [0, 24], sizes = [8, 8], strides = [1, 1]} : vector<8x32xf32> to vector<8x8xf32>
    %151 = vector.extract_strided_slice %17 {offsets = [0, 24], sizes = [8, 8], strides = [1, 1]} : vector<8x32xf32> to vector<8x8xf32>
    %152 = arith.mulf %149, %147 : vector<8x8xf32>
    %153 = vector.extract_strided_slice %149 {offsets = [0, 4], sizes = [8, 4], strides = [1, 1]} : vector<8x8xf32> to vector<8x4xf32>
    %cst_56 = arith.constant 0.000000e+00 : f32
    %154 = vector.broadcast %cst_56 : f32 to vector<8x4xf32>
    %155 = arith.subf %154, %153 : vector<8x4xf32>
    %156 = vector.extract_strided_slice %149 {offsets = [0, 0], sizes = [8, 4], strides = [1, 1]} : vector<8x8xf32> to vector<8x4xf32>
    %157 = tpu.concatenate %155, %156 in 1 : vector<8x4xf32>, vector<8x4xf32> -> vector<8x8xf32>
    %158 = arith.mulf %157, %148 : vector<8x8xf32>
    %159 = arith.addf %152, %158 : vector<8x8xf32>
    %160 = arith.mulf %150, %147 : vector<8x8xf32>
    %161 = vector.extract_strided_slice %150 {offsets = [0, 4], sizes = [8, 4], strides = [1, 1]} : vector<8x8xf32> to vector<8x4xf32>
    %cst_57 = arith.constant 0.000000e+00 : f32
    %162 = vector.broadcast %cst_57 : f32 to vector<8x4xf32>
    %163 = arith.subf %162, %161 : vector<8x4xf32>
    %164 = vector.extract_strided_slice %150 {offsets = [0, 0], sizes = [8, 4], strides = [1, 1]} : vector<8x8xf32> to vector<8x4xf32>
    %165 = tpu.concatenate %163, %164 in 1 : vector<8x4xf32>, vector<8x4xf32> -> vector<8x8xf32>
    %166 = arith.mulf %165, %148 : vector<8x8xf32>
    %167 = arith.addf %160, %166 : vector<8x8xf32>
    %168 = arith.truncf %159 : vector<8x8xf32> to vector<8x8xbf16>
    %169 = arith.truncf %167 : vector<8x8xf32> to vector<8x8xbf16>
    %cst_58 = arith.constant dense<0.000000e+00> : vector<8x8xf32>
    %170 = tpu.matmul %168, %169, %cst_58 {dimension_numbers = #tpu.dot_dimension_numbers<[1], [1], [0], [0], [0, 0, 1, 0], [], []>} : vector<8x8xbf16>, vector<8x8xbf16>, vector<8x8xf32> -> vector<8x8xf32>
    %cst_59 = arith.constant 0.353553385 : f32
    %171 = vector.broadcast %cst_59 : f32 to vector<8x8xf32>
    %172 = arith.mulf %170, %171 : vector<8x8xf32>
    %cst_60 = arith.constant -1.000000e+30 : f32
    %173 = vector.broadcast %cst_60 : f32 to vector<8x8xf32>
    %174 = arith.select %20, %172, %173 : vector<8x8xi1>, vector<8x8xf32>
    %cst_61 = arith.constant dense<0xFF800000> : vector<8xf32>
    %175 = vector.multi_reduction <maximumf>, %174, %cst_61 [1] : vector<8x8xf32> to vector<8xf32>
    %176 = vector.shape_cast %175 : vector<8xf32> to vector<8x1xf32>
    %177 = vector.broadcast %176 : vector<8x1xf32> to vector<8x8xf32>
    %178 = arith.subf %174, %177 : vector<8x8xf32>
    %179 = math.exp %178 : vector<8x8xf32>
    %cst_62 = arith.constant dense<0.000000e+00> : vector<8xf32>
    %180 = vector.multi_reduction <add>, %179, %cst_62 [1] : vector<8x8xf32> to vector<8xf32>
    %181 = vector.shape_cast %180 : vector<8xf32> to vector<8x1xf32>
    %182 = tpu.reciprocal %181 {approx = true} : vector<8x1xf32> -> vector<8x1xf32>
    %183 = vector.broadcast %182 : vector<8x1xf32> to vector<8x8xf32>
    %184 = arith.mulf %179, %183 : vector<8x8xf32>
    %185 = arith.truncf %184 : vector<8x8xf32> to vector<8x8xbf16>
    %186 = arith.truncf %151 : vector<8x8xf32> to vector<8x8xbf16>
    %cst_63 = arith.constant dense<0.000000e+00> : vector<8x8xf32>
    %187 = tpu.matmul %185, %186, %cst_63 {dimension_numbers = #tpu.dot_dimension_numbers<[1], [0], [0], [1], [0, 0, 1, 1], [], []>} : vector<8x8xbf16>, vector<8x8xbf16>, vector<8x8xf32> -> vector<8x8xf32>
    %c0_64 = arith.constant 0 : index
    %c24_65 = arith.constant 24 : index
    %188 = vector.load %arg11[%c0_64, %c24_65] : memref<8x32xf32, #tpu.memory_space<vmem>>, vector<8x8xf32>
    tpu.vector_store %arg11[%c0_64, %c24_65], %187 {strides = array<i32>} : memref<8x32xf32, #tpu.memory_space<vmem>>, vector<8x8xf32>,
    %c0_66 = arith.constant 0 : index
    %c0_67 = arith.constant 0 : index
    %189 = vector.load %arg11[%c0_66, %c0_67] : memref<8x32xf32, #tpu.memory_space<vmem>>, vector<8x32xf32>
    %190 = arith.truncf %189 : vector<8x32xf32> to vector<8x32xbf16>
    %c0_68 = arith.constant 0 : index
    %c0_69 = arith.constant 0 : index
    %191 = vector.load %arg8[%c0_68, %c0_69] : memref<32x32xbf16, #tpu.memory_space<vmem>>, vector<32x32xbf16>
    %cst_70 = arith.constant dense<0.000000e+00> : vector<8x32xf32>
    %192 = tpu.matmul %190, %191, %cst_70 {dimension_numbers = #tpu.dot_dimension_numbers<[1], [0], [0], [1], [0, 0, 1, 1], [], []>} : vector<8x32xbf16>, vector<32x32xbf16>, vector<8x32xf32> -> vector<8x32xf32>
    %c0_71 = arith.constant 0 : index
    %c0_72 = arith.constant 0 : index
    %193 = vector.load %arg9[%c0_71, %c0_72] : memref<1x32xf32, #tpu.memory_space<vmem>>, vector<1x32xf32>
    %194 = vector.broadcast %193 : vector<1x32xf32> to vector<8x32xf32>
    %195 = arith.addf %192, %194 : vector<8x32xf32>
    %c0_73 = arith.constant 0 : index
    %c0_74 = arith.constant 0 : index
    %c0_75 = arith.constant 0 : index
    %196 = vector.load %arg10[%c0_73, %c0_74, %c0_75] : memref<1x8x32xf32, #tpu.memory_space<vmem>>, vector<1x8x32xf32>
    %197 = vector.shape_cast %196 : vector<1x8x32xf32> to vector<8x32xf32>
    %198 = vector.shape_cast %195 : vector<8x32xf32> to vector<1x8x32xf32>
    tpu.vector_store %arg10[%c0_73, %c0_74, %c0_75], %198 {strides = array<i32>} : memref<1x8x32xf32, #tpu.memory_space<vmem>>, vector<1x8x32xf32>,
    return
  }
  func.func @transform_0(%arg0: i32) -> (i32, i32, i32) {
    %c0_i32 = arith.constant 0 : i32
    %c0_i32_0 = arith.constant 0 : i32
    %c0_i32_1 = arith.constant 0 : i32
    return %arg0, %c0_i32, %c0_i32_0 : i32, i32, i32
  }
  func.func @transform_1(%arg0: i32) -> (i32, i32) {
    %c0_i32 = arith.constant 0 : i32
    %c0_i32_0 = arith.constant 0 : i32
    %c0_i32_1 = arith.constant 0 : i32
    return %c0_i32, %c0_i32_0 : i32, i32
  }
  func.func @transform_2(%arg0: i32) -> (i32, i32) {
    %c0_i32 = arith.constant 0 : i32
    %c0_i32_0 = arith.constant 0 : i32
    %c0_i32_1 = arith.constant 0 : i32
    return %c0_i32, %c0_i32_0 : i32, i32
  }
  func.func @transform_3(%arg0: i32) -> (i32, i32) {
    %c0_i32 = arith.constant 0 : i32
    %c0_i32_0 = arith.constant 0 : i32
    %c0_i32_1 = arith.constant 0 : i32
    return %c0_i32, %c0_i32_0 : i32, i32
  }
  func.func @transform_4(%arg0: i32) -> (i32, i32) {
    %c0_i32 = arith.constant 0 : i32
    %c0_i32_0 = arith.constant 0 : i32
    %c0_i32_1 = arith.constant 0 : i32
    return %c0_i32, %c0_i32_0 : i32, i32
  }
  func.func @transform_5(%arg0: i32) -> (i32, i32) {
    %c0_i32 = arith.constant 0 : i32
    %c0_i32_0 = arith.constant 0 : i32
    %c0_i32_1 = arith.constant 0 : i32
    return %c0_i32, %c0_i32_0 : i32, i32
  }
  func.func @transform_6(%arg0: i32) -> (i32, i32) {
    %c0_i32 = arith.constant 0 : i32
    %c0_i32_0 = arith.constant 0 : i32
    %c0_i32_1 = arith.constant 0 : i32
    return %c0_i32, %c0_i32_0 : i32, i32
  }
  func.func @transform_7(%arg0: i32) -> (i32, i32) {
    %c0_i32 = arith.constant 0 : i32
    %c0_i32_0 = arith.constant 0 : i32
    %c0_i32_1 = arith.constant 0 : i32
    return %c0_i32, %c0_i32_0 : i32, i32
  }
  func.func @transform_8(%arg0: i32) -> (i32, i32) {
    %c0_i32 = arith.constant 0 : i32
    %c0_i32_0 = arith.constant 0 : i32
    %c0_i32_1 = arith.constant 0 : i32
    return %c0_i32, %c0_i32_0 : i32, i32
  }
  func.func @transform_9(%arg0: i32) -> (i32, i32, i32) {
    %c0_i32 = arith.constant 0 : i32
    %c0_i32_0 = arith.constant 0 : i32
    %c0_i32_1 = arith.constant 0 : i32
    return %arg0, %c0_i32, %c0_i32_0 : i32, i32, i32
  }
}

</mosaic_0001>

<llo_original>
// kernel: tpu_custom_call.1
$region0: #{tpu_custom_call.1}
  #allocation0 [shape = 'u32[]', space=smem, size = 0x4, offset = 0x4, fixed_abs, tag = 'smem constant byte address 0x4 - core index']
  #allocation1 [shape = 'u32[144,128]{1,0:T(1,128)}', space=vmem, size = 0x12000, scoped, tag = 'internal scratch']
  #allocation2 [shape = 'f32[8,32]{1,0:T(8,128)}', space=vmem, size = 0x1000, scoped, tag = 'scratch operand']
  %s0 = inlined_call_operand.hbm [shape: bf16[2,8,32], index: 0, kind: input, shape index: {}]
  %s1 = inlined_call_operand.hbm [shape: f32[8,32], index: 1, kind: input, shape index: {}]
  %s2 = inlined_call_operand.hbm [shape: f32[8,32], index: 2, kind: input, shape index: {}]
  %s3 = inlined_call_operand.vmem [shape: bf16[32,96], index: 3, kind: input, shape index: {}]
  %s4 = inlined_call_operand.hbm [shape: f32[1,96], index: 4, kind: input, shape index: {}]
  %s5 = inlined_call_operand.vmem [shape: bf16[32,8], index: 5, kind: input, shape index: {}]
  %s6 = inlined_call_operand.hbm [shape: bf16[8,96], index: 6, kind: input, shape index: {}]
  %s7 = inlined_call_operand.vmem [shape: bf16[32,32], index: 7, kind: input, shape index: {}]
  %s8 = inlined_call_operand.vmem [shape: f32[1,32], index: 8, kind: input, shape index: {}]
  %s9 = inlined_call_operand.hbm [shape: f32[2,8,32], index: 9, kind: output, shape index: {}]
  %s10 = sld [smem:[#allocation0]]
  $region89: #{tpu_custom_call.1} parent=0
    _
  %s12 = ssub.s32 1, %s10
  %s13 = scalar_select 0, %s12, %s10
  $region1: #{tpu_custom_call.1} parent=0
    #allocation3 [shape = 'u8[4096]{0}', space=vmem, size = 0x1000, scoped, tag = 'input window, operand 0']
    #allocation4 [shape = 's32[2]{0}', space=sflag, size = 0x8, scoped, tag = 'scoped memory for tpu_custom_call.1']
    #allocation5 [shape = 's32[2]{0}', space=sflag, size = 0x8, scoped, tag = 'scoped memory for tpu_custom_call.1']
    #allocation6 [shape = 'u8[4096]{0}', space=vmem, size = 0x1000, scoped, tag = 'input window, operand 1, single buffered']
    #allocation7 [shape = 's32[1]{0}', space=sflag, size = 0x4, scoped, tag = 'scoped memory for tpu_custom_call.1']
    #allocation8 [shape = 'u8[4096]{0}', space=vmem, size = 0x1000, scoped, tag = 'input window, operand 2, single buffered']
    #allocation9 [shape = 'u8[512]{0}', space=vmem, size = 0x400, scoped, tag = 'input window, operand 4, single buffered']
    #allocation10 [shape = 's32[1]{0}', space=sflag, size = 0x4, scoped, tag = 'scoped memory for tpu_custom_call.1']
    #allocation11 [shape = 'u8[2048]{0}', space=vmem, size = 0x800, scoped, tag = 'input window, operand 6, single buffered']
    #allocation12 [shape = 'u8[8192]{0}', space=vmem, size = 0x2000, scoped, tag = 'output window, operand 0']
    %14 = vsyncpa [#allocation4], 0
    %s15 = scalar_lea.sflag [#allocation4], 1
    %16 = vsyncpa %s15, 0
    %17 = vsyncpa [#allocation7], 0
    %18 = vsyncpa [#allocation10], 0
    %19 = vsyncpa [#allocation5], 0
    %s20 = scalar_lea.sflag [#allocation5], 1
    %21 = vsyncpa %s20, 0
    loop: start=0, step=1, limit=4
    $region2: #{tpu_custom_call.1} parent=1 // loop_pre_header
      _
    $region3: #{tpu_custom_call.1} parent=1 // loop_header
      %s23 = sphi 0, %s27
      %p24 = scmp.ge.s32.totalorder %s23, 4
      %s33 = sphi 0, %s35
      %s36 = sphi 0, %s33
      %s37 = sphi 0, %s36
      %s53 = sphi 0, %s37
      %s57 = sphi 0, %s57
      %s59 = sphi 0, %s57
      %s60 = sphi 0, %s59
      %s74 = sphi 0, %s60
      %s78 = sphi 0, %s78
      %s80 = sphi 0, %s78
      %s81 = sphi 0, %s80
      %s95 = sphi 0, %s81
      %s99 = sphi 0, %s99
      %s101 = sphi 0, %s99
      %s102 = sphi 0, %s101
      %s116 = sphi 0, %s102
      %s120 = sphi 0, %s120
      %s122 = sphi 0, %s120
      %s123 = sphi 0, %s122
      %s137 = sphi 0, %s123
      %s141 = sphi 0, %s141
      %s143 = sphi 0, %s141
      %s144 = sphi 0, %s143
      %s158 = sphi 0, %s144
      %s162 = sphi 0, %s162
      %s164 = sphi 0, %s162
      %s165 = sphi 0, %s164
      %s179 = sphi 0, %s165
      %s183 = sphi 0, %s183
      %s185 = sphi 0, %s183
      %s186 = sphi 0, %s185
      %s200 = sphi 0, %s186
      %s204 = sphi 0, %s204
      %s206 = sphi 0, %s204
      %s207 = sphi 0, %s206
      %s221 = sphi 0, %s207
      %s227 = sphi 0, %s229
      %s230 = sphi 0, %s227
      %s231 = sphi 0, %s230
      %s247 = sphi 0, %s231
    $region4: #{tpu_custom_call.1} parent=1 // loop_header_branch
      %26 = sbr.rel (%p24) target = $region8
    $region5: #{tpu_custom_call.1} parent=1 // loop_body
      %s28 = ssub.s32 %s23, 1
      %s29 = ssub.s32 %s23, 2
      %s30 = sadd.s32 %s23, 1
      %s31 = ssub.s32 %s23, %s30
      %p32 = scmp.eq.s32.totalorder %s31, 0
      %s34 = sadd.s32 %s33, 1
      %s35 = scalar_select %p32, %s33, %s34
      %p38 = pneg %p32
      %p39 = scmp.eq.s32.totalorder %s23, 1
      %p40 = por %p38, %p39
      %p41 = scmp.ne.s32.totalorder %s33, %s36
      %p42 = scmp.eq.s32.totalorder %s23, 0
      %p43 = por %p41, %p42
      %p44 = scmp.ne.s32.totalorder %s33, %s36
      %p45 = scmp.eq.s32.totalorder %s28, 1
      %p46 = por %p44, %p45
      %p47 = scmp.ne.s32.totalorder %s36, %s37
      %p48 = scmp.eq.s32.totalorder %s28, 0
      %p49 = por %p47, %p48
      %p50 = scmp.ne.s32.totalorder %s36, %s37
      %p51 = scmp.eq.s32.totalorder %s29, 1
      %p52 = por %p50, %p51
      %p54 = scmp.ne.s32.totalorder %s37, %s53
      %p55 = scmp.eq.s32.totalorder %s29, 0
      %p56 = por %p54, %p55
      %s58 = sadd.s32 %s57, 1
      %p61 = scmp.eq.s32.totalorder %s23, 1
      %p62 = scmp.ne.s32.totalorder %s57, %s59
      %p63 = scmp.eq.s32.totalorder %s23, 0
      %p64 = por %p62, %p63
      %p65 = scmp.ne.s32.totalorder %s57, %s59
      %p66 = scmp.eq.s32.totalorder %s28, 1
      %p67 = por %p65, %p66
      %p68 = scmp.ne.s32.totalorder %s59, %s60
      %p69 = scmp.eq.s32.totalorder %s28, 0
      %p70 = por %p68, %p69
      %p71 = scmp.ne.s32.totalorder %s59, %s60
      %p72 = scmp.eq.s32.totalorder %s29, 1
      %p73 = por %p71, %p72
      %p75 = scmp.ne.s32.totalorder %s60, %s74
      %p76 = scmp.eq.s32.totalorder %s29, 0
      %p77 = por %p75, %p76
      %s79 = sadd.s32 %s78, 1
      %p82 = scmp.eq.s32.totalorder %s23, 1
      %p83 = scmp.ne.s32.totalorder %s78, %s80
      %p84 = scmp.eq.s32.totalorder %s23, 0
      %p85 = por %p83, %p84
      %p86 = scmp.ne.s32.totalorder %s78, %s80
      %p87 = scmp.eq.s32.totalorder %s28, 1
      %p88 = por %p86, %p87
      %p89 = scmp.ne.s32.totalorder %s80, %s81
      %p90 = scmp.eq.s32.totalorder %s28, 0
      %p91 = por %p89, %p90
      %p92 = scmp.ne.s32.totalorder %s80, %s81
      %p93 = scmp.eq.s32.totalorder %s29, 1
      %p94 = por %p92, %p93
      %p96 = scmp.ne.s32.totalorder %s81, %s95
      %p97 = scmp.eq.s32.totalorder %s29, 0
      %p98 = por %p96, %p97
      %s100 = sadd.s32 %s99, 1
      %p103 = scmp.eq.s32.totalorder %s23, 1
      %p104 = scmp.ne.s32.totalorder %s99, %s101
      %p105 = scmp.eq.s32.totalorder %s23, 0
      %p106 = por %p104, %p105
      %p107 = scmp.ne.s32.totalorder %s99, %s101
      %p108 = scmp.eq.s32.totalorder %s28, 1
      %p109 = por %p107, %p108
      %p110 = scmp.ne.s32.totalorder %s101, %s102
      %p111 = scmp.eq.s32.totalorder %s28, 0
      %p112 = por %p110, %p111
      %p113 = scmp.ne.s32.totalorder %s101, %s102
      %p114 = scmp.eq.s32.totalorder %s29, 1
      %p115 = por %p113, %p114
      %p117 = scmp.ne.s32.totalorder %s102, %s116
      %p118 = scmp.eq.s32.totalorder %s29, 0
      %p119 = por %p117, %p118
      %s121 = sadd.s32 %s120, 1
      %p124 = scmp.eq.s32.totalorder %s23, 1
      %p125 = scmp.ne.s32.totalorder %s120, %s122
      %p126 = scmp.eq.s32.totalorder %s23, 0
      %p127 = por %p125, %p126
      %p128 = scmp.ne.s32.totalorder %s120, %s122
      %p129 = scmp.eq.s32.totalorder %s28, 1
      %p130 = por %p128, %p129
      %p131 = scmp.ne.s32.totalorder %s122, %s123
      %p132 = scmp.eq.s32.totalorder %s28, 0
      %p133 = por %p131, %p132
      %p134 = scmp.ne.s32.totalorder %s122, %s123
      %p135 = scmp.eq.s32.totalorder %s29, 1
      %p136 = por %p134, %p135
      %p138 = scmp.ne.s32.totalorder %s123, %s137
      %p139 = scmp.eq.s32.totalorder %s29, 0
      %p140 = por %p138, %p139
      %s142 = sadd.s32 %s141, 1
      %p145 = scmp.eq.s32.totalorder %s23, 1
      %p146 = scmp.ne.s32.totalorder %s141, %s143
      %p147 = scmp.eq.s32.totalorder %s23, 0
      %p148 = por %p146, %p147
      %p149 = scmp.ne.s32.totalorder %s141, %s143
      %p150 = scmp.eq.s32.totalorder %s28, 1
      %p151 = por %p149, %p150
      %p152 = scmp.ne.s32.totalorder %s143, %s144
      %p153 = scmp.eq.s32.totalorder %s28, 0
      %p154 = por %p152, %p153
      %p155 = scmp.ne.s32.totalorder %s143, %s144
      %p156 = scmp.eq.s32.totalorder %s29, 1
      %p157 = por %p155, %p156
      %p159 = scmp.ne.s32.totalorder %s144, %s158
      %p160 = scmp.eq.s32.totalorder %s29, 0
      %p161 = por %p159, %p160
      %s163 = sadd.s32 %s162, 1
      %p166 = scmp.eq.s32.totalorder %s23, 1
      %p167 = scmp.ne.s32.totalorder %s162, %s164
      %p168 = scmp.eq.s32.totalorder %s23, 0
      %p169 = por %p167, %p168
      %p170 = scmp.ne.s32.totalorder %s162, %s164
      %p171 = scmp.eq.s32.totalorder %s28, 1
      %p172 = por %p170, %p171
      %p173 = scmp.ne.s32.totalorder %s164, %s165
      %p174 = scmp.eq.s32.totalorder %s28, 0
      %p175 = por %p173, %p174
      %p176 = scmp.ne.s32.totalorder %s164, %s165
      %p177 = scmp.eq.s32.totalorder %s29, 1
      %p178 = por %p176, %p177
      %p180 = scmp.ne.s32.totalorder %s165, %s179
      %p181 = scmp.eq.s32.totalorder %s29, 0
      %p182 = por %p180, %p181
      %s184 = sadd.s32 %s183, 1
      %p187 = scmp.eq.s32.totalorder %s23, 1
      %p188 = scmp.ne.s32.totalorder %s183, %s185
      %p189 = scmp.eq.s32.totalorder %s23, 0
      %p190 = por %p188, %p189
      %p191 = scmp.ne.s32.totalorder %s183, %s185
      %p192 = scmp.eq.s32.totalorder %s28, 1
      %p193 = por %p191, %p192
      %p194 = scmp.ne.s32.totalorder %s185, %s186
      %p195 = scmp.eq.s32.totalorder %s28, 0
      %p196 = por %p194, %p195
      %p197 = scmp.ne.s32.totalorder %s185, %s186
      %p198 = scmp.eq.s32.totalorder %s29, 1
      %p199 = por %p197, %p198
      %p201 = scmp.ne.s32.totalorder %s186, %s200
      %p202 = scmp.eq.s32.totalorder %s29, 0
      %p203 = por %p201, %p202
      %s205 = sadd.s32 %s204, 1
      %p208 = scmp.eq.s32.totalorder %s23, 1
      %p209 = scmp.ne.s32.totalorder %s204, %s206
      %p210 = scmp.eq.s32.totalorder %s23, 0
      %p211 = por %p209, %p210
      %p212 = scmp.ne.s32.totalorder %s204, %s206
      %p213 = scmp.eq.s32.totalorder %s28, 1
      %p214 = por %p212, %p213
      %p215 = scmp.ne.s32.totalorder %s206, %s207
      %p216 = scmp.eq.s32.totalorder %s28, 0
      %p217 = por %p215, %p216
      %p218 = scmp.ne.s32.totalorder %s206, %s207
      %p219 = scmp.eq.s32.totalorder %s29, 1
      %p220 = por %p218, %p219
      %p222 = scmp.ne.s32.totalorder %s207, %s221
      %p223 = scmp.eq.s32.totalorder %s29, 0
      %p224 = por %p222, %p223
      %s225 = ssub.s32 %s23, %s30
      %p226 = scmp.eq.s32.totalorder %s225, 0
      %s228 = sadd.s32 %s227, 1
      %s229 = scalar_select %p226, %s227, %s228
      %p232 = pneg %p226
      %p233 = scmp.eq.s32.totalorder %s23, 1
      %p234 = por %p232, %p233
      %p235 = scmp.ne.s32.totalorder %s227, %s230
      %p236 = scmp.eq.s32.totalorder %s23, 0
      %p237 = por %p235, %p236
      %p238 = scmp.ne.s32.totalorder %s227, %s230
      %p239 = scmp.eq.s32.totalorder %s28, 1
      %p240 = por %p238, %p239
      %p241 = scmp.ne.s32.totalorder %s230, %s231
      %p242 = scmp.eq.s32.totalorder %s28, 0
      %p243 = por %p241, %p242
      %p244 = scmp.ne.s32.totalorder %s230, %s231
      %p245 = scmp.eq.s32.totalorder %s29, 1
      %p246 = por %p244, %p245
      %p248 = scmp.ne.s32.totalorder %s231, %s247
      %p249 = scmp.eq.s32.totalorder %s29, 0
      %p250 = por %p248, %p249
      %p251 = scmp.le.s32.totalorder 1, %s23
      %p252 = scmp.lt.s32.totalorder %s23, 3
      %p253 = pnand %p251, %p252
      %p254 = pneg %p253
      // Predicated region
      $region9: #{tpu_custom_call.1} parent=5 // pred_check
        _
      $region10: #{tpu_custom_call.1} parent=5 // pred_check_branch
        %256 = sbr.rel (%p253) target = $region12
      $region11: #{tpu_custom_call.1} parent=5 // pred_region
        %s257 = ssub.s32 %s23, 1
        // Predicated region
        $region13: #{tpu_custom_call.1} parent=11 // pred_check
          %p258 = pneg %p70
        $region14: #{tpu_custom_call.1} parent=11 // pred_check_branch
          %260 = sbr.rel (%p258) target = $region16
        $region15: #{tpu_custom_call.1} parent=11 // pred_region
          %s262 = ssub.s32 128, 128
          %263 = vsyncadd [#allocation7], %s262
          %s265 = sshll.u32 [#allocation6], 4
          %s266 = int_to_ptr.vmem [resolvable:$true] %s265
          %268 = dma.hbm_to_vmem [thread:$0]  %s1, 128, %s266, [#allocation7]
        $region16: #{tpu_custom_call.1} parent=11 // pred_fallthru
          _
        // Predicated region
        $region17: #{tpu_custom_call.1} parent=11 // pred_check
          %p269 = pneg %p91
        $region18: #{tpu_custom_call.1} parent=11 // pred_check_branch
          %271 = sbr.rel (%p269) target = $region20
        $region19: #{tpu_custom_call.1} parent=11 // pred_region
          %s273 = ssub.s32 128, 128
          %274 = vsyncadd [#allocation7], %s273
          %s276 = sshll.u32 [#allocation8], 4
          %s277 = int_to_ptr.vmem [resolvable:$true] %s276
          %279 = dma.hbm_to_vmem [thread:$0]  %s2, 128, %s277, [#allocation7]
        $region20: #{tpu_custom_call.1} parent=11 // pred_fallthru
          _
        // Predicated region
        $region21: #{tpu_custom_call.1} parent=11 // pred_check
          %p280 = pneg %p112
        $region22: #{tpu_custom_call.1} parent=11 // pred_check_branch
          %282 = sbr.rel (%p280) target = $region24
        $region23: #{tpu_custom_call.1} parent=11 // pred_region
          _
        $region24: #{tpu_custom_call.1} parent=11 // pred_fallthru
          _
        // Predicated region
        $region25: #{tpu_custom_call.1} parent=11 // pred_check
          %p283 = pneg %p133
        $region26: #{tpu_custom_call.1} parent=11 // pred_check_branch
          %285 = sbr.rel (%p283) target = $region28
        $region27: #{tpu_custom_call.1} parent=11 // pred_region
          %s287 = ssub.s32 16, 16
          %288 = vsyncadd [#allocation10], %s287
          %s290 = sshll.u32 [#allocation9], 4
          %s291 = int_to_ptr.vmem [resolvable:$true] %s290
          %293 = dma.hbm_to_vmem [thread:$0]  %s4, 16, %s291, [#allocation10]
        $region28: #{tpu_custom_call.1} parent=11 // pred_fallthru
          _
        // Predicated region
        $region29: #{tpu_custom_call.1} parent=11 // pred_check
          %p294 = pneg %p154
        $region30: #{tpu_custom_call.1} parent=11 // pred_check_branch
          %296 = sbr.rel (%p294) target = $region32
        $region31: #{tpu_custom_call.1} parent=11 // pred_region
          _
        $region32: #{tpu_custom_call.1} parent=11 // pred_fallthru
          _
        // Predicated region
        $region33: #{tpu_custom_call.1} parent=11 // pred_check
          %p297 = pneg %p175
        $region34: #{tpu_custom_call.1} parent=11 // pred_check_branch
          %299 = sbr.rel (%p297) target = $region36
        $region35: #{tpu_custom_call.1} parent=11 // pred_region
          %s301 = ssub.s32 64, 64
          %302 = vsyncadd [#allocation10], %s301
          %s304 = sshll.u32 [#allocation11], 4
          %s305 = int_to_ptr.vmem [resolvable:$true] %s304
          %307 = dma.hbm_to_vmem [thread:$0]  %s6, 64, %s305, [#allocation10]
        $region36: #{tpu_custom_call.1} parent=11 // pred_fallthru
          _
        // Predicated region
        $region37: #{tpu_custom_call.1} parent=11 // pred_check
          %p308 = pneg %p196
        $region38: #{tpu_custom_call.1} parent=11 // pred_check_branch
          %310 = sbr.rel (%p308) target = $region40
        $region39: #{tpu_custom_call.1} parent=11 // pred_region
          _
        $region40: #{tpu_custom_call.1} parent=11 // pred_fallthru
          _
        // Predicated region
        $region41: #{tpu_custom_call.1} parent=11 // pred_check
          %p311 = pneg %p217
        $region42: #{tpu_custom_call.1} parent=11 // pred_check_branch
          %313 = sbr.rel (%p311) target = $region44
        $region43: #{tpu_custom_call.1} parent=11 // pred_region
          _
        $region44: #{tpu_custom_call.1} parent=11 // pred_fallthru
          _
      $region12: #{tpu_custom_call.1} parent=5 // pred_fallthru
        _
      %p314 = scmp.lt.s32.totalorder %s23, 2
      // Predicated region
      $region45: #{tpu_custom_call.1} parent=5 // pred_check
        %p315 = pneg %p314
      $region46: #{tpu_custom_call.1} parent=5 // pred_check_branch
        %317 = sbr.rel (%p315) target = $region48
      $region47: #{tpu_custom_call.1} parent=5 // pred_region
        // Predicated region
        $region49: #{tpu_custom_call.1} parent=47 // pred_check
          %p318 = pneg %p43
        $region50: #{tpu_custom_call.1} parent=47 // pred_check_branch
          %320 = sbr.rel (%p318) target = $region52
        $region51: #{tpu_custom_call.1} parent=47 // pred_region
          %s321 = sand.u32 %s33, 1
          %s322 = scalar_lea.sflag [#allocation4], %s321
          %s323 = sand.u32 %s33, 1
          %s324 = smul.addr %s323, 4
          %s325 = scalar_lea.vmem [#allocation3], %s324
          %s327 = ssub.s32 64, 64
          %328 = vsyncadd %s322, %s327
          %s329 = smul.addr %s23, 64
          %s330 = scalar_lea.hbm %s0, %s329
          %s332 = sshll.u32 %s325, 4
          %s333 = int_to_ptr.vmem [resolvable:$true] %s332
          %335 = dma.hbm_to_vmem [thread:$0]  %s330, 64, %s333, %s322
        $region52: #{tpu_custom_call.1} parent=47 // pred_fallthru
          _
      $region48: #{tpu_custom_call.1} parent=5 // pred_fallthru
        _
      %p336 = scmp.le.s32.totalorder 1, %s23
      %p337 = scmp.lt.s32.totalorder %s23, 3
      %p338 = pnand %p336, %p337
      %p339 = pneg %p338
      // Predicated region
      $region53: #{tpu_custom_call.1} parent=5 // pred_check
        _
      $region54: #{tpu_custom_call.1} parent=5 // pred_check_branch
        %341 = sbr.rel (%p338) target = $region56
      $region55: #{tpu_custom_call.1} parent=5 // pred_region
        %s342 = ssub.s32 %s23, 1
        %s343 = sand.u32 %s36, 1
        %s344 = scalar_lea.sflag [#allocation4], %s343
        %s345 = sand.u32 %s36, 1
        %s346 = smul.addr %s345, 4
        %s347 = scalar_lea.vmem [#allocation3], %s346
        // Predicated region
        $region57: #{tpu_custom_call.1} parent=55 // pred_check
          %p348 = pneg %p49
        $region58: #{tpu_custom_call.1} parent=55 // pred_check_branch
          %350 = sbr.rel (%p348) target = $region60
        $region59: #{tpu_custom_call.1} parent=55 // pred_region
          %351 = dma.done %s344, 64
        $region60: #{tpu_custom_call.1} parent=55 // pred_fallthru
          _
        // Predicated region
        $region61: #{tpu_custom_call.1} parent=55 // pred_check
          %p352 = pneg %p70
        $region62: #{tpu_custom_call.1} parent=55 // pred_check_branch
          %354 = sbr.rel (%p352) target = $region64
        $region63: #{tpu_custom_call.1} parent=55 // pred_region
          %355 = dma.done [#allocation7], 128
        $region64: #{tpu_custom_call.1} parent=55 // pred_fallthru
          _
        // Predicated region
        $region65: #{tpu_custom_call.1} parent=55 // pred_check
          %p356 = pneg %p91
        $region66: #{tpu_custom_call.1} parent=55 // pred_check_branch
          %358 = sbr.rel (%p356) target = $region68
        $region67: #{tpu_custom_call.1} parent=55 // pred_region
          %359 = dma.done [#allocation7], 128
        $region68: #{tpu_custom_call.1} parent=55 // pred_fallthru
          _
        // Predicated region
        $region69: #{tpu_custom_call.1} parent=55 // pred_check
          %p360 = pneg %p133
        $region70: #{tpu_custom_call.1} parent=55 // pred_check_branch
          %362 = sbr.rel (%p360) target = $region72
        $region71: #{tpu_custom_call.1} parent=55 // pred_region
          %363 = dma.done [#allocation10], 16
        $region72: #{tpu_custom_call.1} parent=55 // pred_fallthru
          _
        // Predicated region
        $region73: #{tpu_custom_call.1} parent=55 // pred_check
          %p364 = pneg %p175
        $region74: #{tpu_custom_call.1} parent=55 // pred_check_branch
          %366 = sbr.rel (%p364) target = $region76
        $region75: #{tpu_custom_call.1} parent=55 // pred_region
          %367 = dma.done [#allocation10], 64
        $region76: #{tpu_custom_call.1} parent=55 // pred_fallthru
          _
        %s368 = sand.u32 %s36, 1
        %s369 = scalar_lea.sflag [#allocation4], %s368
        %s370 = sand.u32 %s36, 1
        %s371 = smul.addr %s370, 4
        %s372 = scalar_lea.vmem [#allocation3], %s371
        %p373 = pneg %p49
        %p374 = pneg %p46
        %p375 = pneg %p70
        %p376 = pneg %p67
        %p377 = pneg %p91
        %p378 = pneg %p88
        %p379 = pneg %p112
        %p380 = pneg %p109
        %p381 = pneg %p133
        %p382 = pneg %p130
        %p383 = pneg %p154
        %p384 = pneg %p151
        %p385 = pneg %p175
        %p386 = pneg %p172
        %p387 = pneg %p196
        %p388 = pneg %p193
        %p389 = pneg %p217
        %p390 = pneg %p214
        %p391 = pneg %p243
        %p392 = pneg %p240
        %s393 = sand.u32 %s230, 1
        %s394 = scalar_lea.sflag [#allocation5], %s393
        %s395 = sand.u32 %s230, 1
        %s396 = smul.addr %s395, 8
        %s397 = scalar_lea.vmem [#allocation12], %s396
        %v399 = vld [vmem:[%s347] sm:$0xf]
        %v400 = vld [vmem:[%s5] sm:$0xf]
        %v401 = vld [vmem:[%s5 + $0x4] sm:$0xf]
        %v402 = vld [vmem:[%s5 + $0x8] sm:$0xf]
        %v403 = vld [vmem:[%s5 + $0xc] sm:$0xf]
        %v408 = vunpack.c.l.b16 %v400
        %v409 = vunpack.c.l.b16 %v401
        %v410 = vunpack.c.l.b16 %v402
        %v411 = vunpack.c.l.b16 %v403
        %v412 = vpack.c.b16 %v409, %v408
        %v413 = vpack.c.b16 %v411, %v410
        %vm416 = vcmask 261120
        %v418 = vsel %vm416, %v399, 0
        %420 = vmatprep.subr.bf16.mxu0 0
        %421 = vmatpush1.bf16.msra.mxu0 0
        %422 = vmatprep.subr.bf16.mxu0 0
        %423 = vmatpush1.bf16.msra.mxu0 0
        %424 = vmatprep.subr.bf16.mxu0 0
        %425 = vmatpush1.bf16.msra.mxu0 0
        %426 = vmatprep.subr.bf16.mxu0 0
        %427 = vmatpush1.bf16.msra.mxu0 0
        %428 = vmatprep.subr.bf16.mxu0 0
        %429 = vmatpush1.bf16.msra.mxu0 0
        %430 = vmatprep.subr.bf16.mxu0 0
        %431 = vmatpush1.bf16.msra.mxu0 0
        %432 = vmatprep.subr.bf16.mxu0 0
        %433 = vmatpush1.bf16.msra.mxu0 %v413
        %434 = vmatprep.subr.bf16.mxu0 0
        %435 = vmatpush1.bf16.msra.mxu0 %v412
        %436 = vmatprep.subr.bf16.mxu0 0
        %437 = vmatpush2.bf16.msra.mxu0 0
        %438 = vmatprep.subr.bf16.mxu0 0
        %439 = vmatpush2.bf16.msra.mxu0 0
        %440 = vmatprep.subr.bf16.mxu0 0
        %441 = vmatpush2.bf16.msra.mxu0 0
        %442 = vmatprep.subr.bf16.mxu0 0
        %443 = vmatpush2.bf16.msra.mxu0 0
        %444 = vmatprep.subr.bf16.mxu0 0
        %445 = vmatpush2.bf16.msra.mxu0 0
        %446 = vmatprep.subr.bf16.mxu0 0
        %447 = vmatpush2.bf16.msra.mxu0 0
        %448 = vmatprep.subr.bf16.mxu0 0
        %449 = vmatpush2.bf16.msra.mxu0 0
        %450 = vmatprep.subr.bf16.mxu0 0
        %451 = vmatpush2.bf16.msra.mxu0 0
        %452 = vmatprep.mubr.bf16.mxu0 0
        %453 = vmatmul.mubr.bf16.gmra.mxu0 %v418
        %v454 = vpop.f32.mrf.mxu0
        %v455 = vadd.f32 0.0, %v454
        %v456 = vpop.f32.mrf.mxu0
        %v457 = vpop.f32.mrf.mxu0
        %v458 = vpop.f32.mrf.mxu0
        %459 = vdwg.mxu0
        %v460 = vld [vmem:[%s3] sm:$0xf]
        %v461 = vld [vmem:[%s3 + $0x4] sm:$0xf]
        %v462 = vld [vmem:[%s3 + $0x8] sm:$0xf]
        %v463 = vld [vmem:[%s3 + $0xc] sm:$0xf]
        %v464 = vpack.c.bf16 %v455, %v455
        %v465 = vld [vmem:[#allocation11] sm:$0xf]
        %vm466 = vcmask 64512
        %v468 = vsel %vm466, %v464, 0
        %vm470 = vcmask 1043456
        %v472 = vsel %vm470, %v465, 0
        %474 = vmatprep.subr.bf16.mxu0 0
        %475 = vmatpush1.bf16.msra.mxu0 0
        %476 = vmatprep.subr.bf16.mxu0 0
        %477 = vmatpush1.bf16.msra.mxu0 0
        %478 = vmatprep.subr.bf16.mxu0 0
        %479 = vmatpush1.bf16.msra.mxu0 0
        %480 = vmatprep.subr.bf16.mxu0 0
        %481 = vmatpush1.bf16.msra.mxu0 0
        %482 = vmatprep.subr.bf16.mxu0 0
        %483 = vmatpush1.bf16.msra.mxu0 0
        %484 = vmatprep.subr.bf16.mxu0 0
        %485 = vmatpush1.bf16.msra.mxu0 0
        %486 = vmatprep.subr.bf16.mxu0 0
        %487 = vmatpush1.bf16.msra.mxu0 0
        %488 = vmatprep.subr.bf16.mxu0 0
        %489 = vmatpush1.bf16.msra.mxu0 %v472
        %490 = vmatprep.subr.bf16.mxu0 0
        %491 = vmatpush2.bf16.msra.mxu0 0
        %492 = vmatprep.subr.bf16.mxu0 0
        %493 = vmatpush2.bf16.msra.mxu0 0
        %494 = vmatprep.subr.bf16.mxu0 0
        %495 = vmatpush2.bf16.msra.mxu0 0
        %496 = vmatprep.subr.bf16.mxu0 0
        %497 = vmatpush2.bf16.msra.mxu0 0
        %498 = vmatprep.subr.bf16.mxu0 0
        %499 = vmatpush2.bf16.msra.mxu0 0
        %500 = vmatprep.subr.bf16.mxu0 0
        %501 = vmatpush2.bf16.msra.mxu0 0
        %502 = vmatprep.subr.bf16.mxu0 0
        %503 = vmatpush2.bf16.msra.mxu0 0
        %504 = vmatprep.subr.bf16.mxu0 0
        %505 = vmatpush2.bf16.msra.mxu0 0
        %506 = vmatprep.mubr.bf16.mxu0 0
        %507 = vmatmul.mubr.bf16.gmra.mxu0 %v468
        %v508 = vpop.f32.mrf.mxu0
        %v509 = vadd.f32 0.0, %v508
        %v510 = vpop.f32.mrf.mxu0
        %v511 = vpop.f32.mrf.mxu0
        %v512 = vpop.f32.mrf.mxu0
        %513 = vdwg.mxu0
        %v514 = vmul.f32 %v509, 2.0
        %v519 = vunpack.c.l.b16 %v460
        %v520 = vunpack.c.l.b16 %v461
        %v521 = vunpack.c.l.b16 %v462
        %v522 = vunpack.c.l.b16 %v463
        %v523 = vpack.c.b16 %v520, %v519
        %v524 = vpack.c.b16 %v522, %v521
        %527 = vmatprep.subr.bf16.mxu0 0
        %528 = vmatpush1.bf16.msra.mxu0 0
        %529 = vmatprep.subr.bf16.mxu0 0
        %530 = vmatpush1.bf16.msra.mxu0 0
        %531 = vmatprep.subr.bf16.mxu0 0
        %532 = vmatpush1.bf16.msra.mxu0 0
        %533 = vmatprep.subr.bf16.mxu0 0
        %534 = vmatpush1.bf16.msra.mxu0 0
        %535 = vmatprep.subr.bf16.mxu0 0
        %536 = vmatpush1.bf16.msra.mxu0 0
        %537 = vmatprep.subr.bf16.mxu0 0
        %538 = vmatpush1.bf16.msra.mxu0 0
        %539 = vmatprep.subr.bf16.mxu0 0
        %540 = vmatpush1.bf16.msra.mxu0 %v524
        %541 = vmatprep.subr.bf16.mxu0 0
        %542 = vmatpush1.bf16.msra.mxu0 %v523
        %543 = vmatprep.subr.bf16.mxu0 0
        %544 = vmatpush2.bf16.msra.mxu0 0
        %545 = vmatprep.subr.bf16.mxu0 0
        %546 = vmatpush2.bf16.msra.mxu0 0
        %547 = vmatprep.subr.bf16.mxu0 0
        %548 = vmatpush2.bf16.msra.mxu0 0
        %549 = vmatprep.subr.bf16.mxu0 0
        %550 = vmatpush2.bf16.msra.mxu0 0
        %551 = vmatprep.subr.bf16.mxu0 0
        %552 = vmatpush2.bf16.msra.mxu0 0
        %553 = vmatprep.subr.bf16.mxu0 0
        %554 = vmatpush2.bf16.msra.mxu0 0
        %555 = vmatprep.subr.bf16.mxu0 0
        %556 = vmatpush2.bf16.msra.mxu0 0
        %557 = vmatprep.subr.bf16.mxu0 0
        %558 = vmatpush2.bf16.msra.mxu0 0
        %559 = vmatprep.mubr.bf16.mxu0 0
        %560 = vmatmul.mubr.bf16.gmra.mxu0 %v418
        %v561 = vpop.f32.mrf.mxu0
        %v562 = vadd.f32 %v514, %v561
        %v563 = vpop.f32.mrf.mxu0
        %v564 = vpop.f32.mrf.mxu0
        %v565 = vpop.f32.mrf.mxu0
        %566 = vdwg.mxu0
        %v567 = vld [vmem:[#allocation9] sm:$0x1]
        %v569 = vlaneseq
        %v570 = vshrl.u32 %v569, 7
        %v571 = vsub.s32 0, %v570
        %v572 = vrot.slane %v567, %v571
        %v574 = vadd.f32 %v562, %v572
        %v575 = vlaneseq
        %v576 = vshrl.u32 %v575, 7
        %v577 = vlaneseq
        %v578 = vand.u32 %v577, 127
        %vm579 = vcmp.ge.s32.totalorder %v576, %v578
        %v580 = vld [vmem:[#allocation6] sm:$0xff]
        %v581 = vld [vmem:[#allocation8] sm:$0xff]
        %v582 = vmul.f32 %v574, %v580
        %v583 = vsub.f32 0.0, %v574
        %585 = vrot.lane.b32.xlu0 %v583, 124
        %v586 = vpop.permute.xlu0 %585
        %589 = vrot.lane.b32.xlu0 %v574, 4
        %v590 = vpop.permute.xlu0 %589
        %vm592 = vcmask 31744
        %v593 = vsel %vm592, %v586, %v590
        %v594 = vmul.f32 %v593, %v581
        %v595 = vadd.f32 %v582, %v594
        %597 = vrot.lane.b32.xlu0 %v580, 32
        %v598 = vpop.permute.xlu0 %597
        %v600 = vmul.f32 %v574, %v598
        %601 = vrot.lane.b32.xlu0 %v583, 92
        %v602 = vpop.permute.xlu0 %601
        %604 = vrot.lane.b32.xlu0 %v574, 100
        %v605 = vpop.permute.xlu0 %604
        %v607 = vsel %vm592, %v602, %v605
        %v608 = vmul.f32 %v607, %v581
        %610 = vrot.lane.b32.xlu0 %v608, 32
        %v611 = vpop.permute.xlu0 %610
        %v613 = vadd.f32 %v600, %v611
        %v614 = vpack.c.bf16 %v595, %v595
        %v615 = vpack.c.bf16 %v613, %v613
        %617 = vrot.lane.b32.xlu0 %v615, 96
        %v618 = vpop.permute.xlu0 %617
        %v620 = vsel %vm466, %v614, 0
        %v623 = vsel %vm466, %v618, 0
        %625 = vmatprep.subr.bf16.mxu0 0
        %626 = vmatpush1.bf16.xpose.msra.mxu0 0
        %627 = vmatprep.subr.bf16.mxu0 0
        %628 = vmatpush1.bf16.xpose.msra.mxu0 0
        %629 = vmatprep.subr.bf16.mxu0 0
        %630 = vmatpush1.bf16.xpose.msra.mxu0 0
        %631 = vmatprep.subr.bf16.mxu0 0
        %632 = vmatpush1.bf16.xpose.msra.mxu0 0
        %633 = vmatprep.subr.bf16.mxu0 0
        %634 = vmatpush1.bf16.xpose.msra.mxu0 0
        %635 = vmatprep.subr.bf16.mxu0 0
        %636 = vmatpush1.bf16.xpose.msra.mxu0 0
        %637 = vmatprep.subr.bf16.mxu0 0
        %638 = vmatpush1.bf16.xpose.msra.mxu0 0
        %639 = vmatprep.subr.bf16.mxu0 0
        %640 = vmatpush1.bf16.xpose.msra.mxu0 %v623
        %641 = vmatprep.subr.bf16.mxu0 0
        %642 = vmatpush2.bf16.xpose.msra.mxu0 0
        %643 = vmatprep.subr.bf16.mxu0 0
        %644 = vmatpush2.bf16.xpose.msra.mxu0 0
        %645 = vmatprep.subr.bf16.mxu0 0
        %646 = vmatpush2.bf16.xpose.msra.mxu0 0
        %647 = vmatprep.subr.bf16.mxu0 0
        %648 = vmatpush2.bf16.xpose.msra.mxu0 0
        %649 = vmatprep.subr.bf16.mxu0 0
        %650 = vmatpush2.bf16.xpose.msra.mxu0 0
        %651 = vmatprep.subr.bf16.mxu0 0
        %652 = vmatpush2.bf16.xpose.msra.mxu0 0
        %653 = vmatprep.subr.bf16.mxu0 0
        %654 = vmatpush2.bf16.xpose.msra.mxu0 0
        %655 = vmatprep.subr.bf16.mxu0 0
        %656 = vmatpush2.bf16.xpose.msra.mxu0 0
        %657 = vmatprep.mubr.bf16.mxu0 0
        %658 = vmatmul.mubr.bf16.gmra.mxu0 %v620
        %v659 = vpop.f32.mrf.mxu0
        %v660 = vadd.f32 0.0, %v659
        %v661 = vpop.f32.mrf.mxu0
        %v662 = vpop.f32.mrf.mxu0
        %v663 = vpop.f32.mrf.mxu0
        %664 = vdwg.mxu0
        %v665 = vmul.f32 %v660, 0.35355338
        %v666 = vsel %vm579, %v665, -1e+30
        %v667 = vsel %vm466, %v666, -inf
        %668 = vmax.xlane.f32.xlu0 %v667
        %v669 = vpop.xlane.xlu0 %668
        %v670 = vsub.f32 %v666, %v669
        %v671 = vmul.f32 %v670, 1.442695
        %v672 = vpow.pop %v671
        %v673 = vsel %vm466, %v672, 0.0
        %674 = vadd.xlane.f32.xlu0 %v673
        %v675 = vpop.xlane.xlu0 %674
        %v676 = vrcp.pop %v675
        %v677 = vmul.f32 %v672, %v676
        %v678 = vpack.c.bf16 %v677, %v677
        %v679 = vpack.c.bf16 %v574, %v574
        %681 = vrot.lane.b32.xlu0 %v679, 64
        %v682 = vpop.permute.xlu0 %681
        %v684 = vsel %vm466, %v678, 0
        %v687 = vsel %vm470, %v682, 0
        %689 = vmatprep.subr.bf16.mxu0 0
        %690 = vmatpush1.bf16.msra.mxu0 0
        %691 = vmatprep.subr.bf16.mxu0 0
        %692 = vmatpush1.bf16.msra.mxu0 0
        %693 = vmatprep.subr.bf16.mxu0 0
        %694 = vmatpush1.bf16.msra.mxu0 0
        %695 = vmatprep.subr.bf16.mxu0 0
        %696 = vmatpush1.bf16.msra.mxu0 0
        %697 = vmatprep.subr.bf16.mxu0 0
        %698 = vmatpush1.bf16.msra.mxu0 0
        %699 = vmatprep.subr.bf16.mxu0 0
        %700 = vmatpush1.bf16.msra.mxu0 0
        %701 = vmatprep.subr.bf16.mxu0 0
        %702 = vmatpush1.bf16.msra.mxu0 0
        %703 = vmatprep.subr.bf16.mxu0 0
        %704 = vmatpush1.bf16.msra.mxu0 %v687
        %705 = vmatprep.subr.bf16.mxu0 0
        %706 = vmatpush2.bf16.msra.mxu0 0
        %707 = vmatprep.subr.bf16.mxu0 0
        %708 = vmatpush2.bf16.msra.mxu0 0
        %709 = vmatprep.subr.bf16.mxu0 0
        %710 = vmatpush2.bf16.msra.mxu0 0
        %711 = vmatprep.subr.bf16.mxu0 0
        %712 = vmatpush2.bf16.msra.mxu0 0
        %713 = vmatprep.subr.bf16.mxu0 0
        %714 = vmatpush2.bf16.msra.mxu0 0
        %715 = vmatprep.subr.bf16.mxu0 0
        %716 = vmatpush2.bf16.msra.mxu0 0
        %717 = vmatprep.subr.bf16.mxu0 0
        %718 = vmatpush2.bf16.msra.mxu0 0
        %719 = vmatprep.subr.bf16.mxu0 0
        %720 = vmatpush2.bf16.msra.mxu0 0
        %721 = vmatprep.mubr.bf16.mxu0 0
        %722 = vmatmul.mubr.bf16.gmra.mxu0 %v684
        %v723 = vpop.f32.mrf.mxu0
        %v724 = vadd.f32 0.0, %v723
        %v725 = vpop.f32.mrf.mxu0
        %v726 = vpop.f32.mrf.mxu0
        %v727 = vpop.f32.mrf.mxu0
        %728 = vdwg.mxu0
        %729 = vst.msk [vmem:[#allocation2] sm:$0xff] %vm466, %v724
        %v730 = vld [vmem:[#allocation6] sm:$0xff]
        %v731 = vld [vmem:[#allocation8] sm:$0xff]
        %v732 = vmul.f32 %v574, %v730
        %733 = vrot.lane.b32.xlu0 %v583, 116
        %v734 = vpop.permute.xlu0 %733
        %736 = vrot.lane.b32.xlu0 %v574, 124
        %v737 = vpop.permute.xlu0 %736
        %v739 = vsel %vm592, %v734, %v737
        %741 = vrot.lane.b32.xlu0 %v731, 120
        %v742 = vpop.permute.xlu0 %741
        %v744 = vmul.f32 %v739, %v742
        %746 = vrot.lane.b32.xlu0 %v744, 8
        %v747 = vpop.permute.xlu0 %746
        %v749 = vadd.f32 %v732, %v747
        %751 = vrot.lane.b32.xlu0 %v730, 32
        %v752 = vpop.permute.xlu0 %751
        %v754 = vmul.f32 %v574, %v752
        %755 = vrot.lane.b32.xlu0 %v583, 84
        %v756 = vpop.permute.xlu0 %755
        %758 = vrot.lane.b32.xlu0 %v574, 92
        %v759 = vpop.permute.xlu0 %758
        %v761 = vsel %vm592, %v756, %v759
        %v762 = vmul.f32 %v761, %v742
        %764 = vrot.lane.b32.xlu0 %v762, 40
        %v765 = vpop.permute.xlu0 %764
        %v767 = vadd.f32 %v754, %v765
        %v768 = vpack.c.bf16 %v749, %v749
        %v769 = vpack.c.bf16 %v767, %v767
        %771 = vrot.lane.b32.xlu0 %v768, 120
        %v772 = vpop.permute.xlu0 %771
        %774 = vrot.lane.b32.xlu0 %v769, 88
        %v775 = vpop.permute.xlu0 %774
        %v777 = vsel %vm466, %v772, 0
        %v780 = vsel %vm466, %v775, 0
        %782 = vmatprep.subr.bf16.mxu0 0
        %783 = vmatpush1.bf16.xpose.msra.mxu0 0
        %784 = vmatprep.subr.bf16.mxu0 0
        %785 = vmatpush1.bf16.xpose.msra.mxu0 0
        %786 = vmatprep.subr.bf16.mxu0 0
        %787 = vmatpush1.bf16.xpose.msra.mxu0 0
        %788 = vmatprep.subr.bf16.mxu0 0
        %789 = vmatpush1.bf16.xpose.msra.mxu0 0
        %790 = vmatprep.subr.bf16.mxu0 0
        %791 = vmatpush1.bf16.xpose.msra.mxu0 0
        %792 = vmatprep.subr.bf16.mxu0 0
        %793 = vmatpush1.bf16.xpose.msra.mxu0 0
        %794 = vmatprep.subr.bf16.mxu0 0
        %795 = vmatpush1.bf16.xpose.msra.mxu0 0
        %796 = vmatprep.subr.bf16.mxu0 0
        %797 = vmatpush1.bf16.xpose.msra.mxu0 %v780
        %798 = vmatprep.subr.bf16.mxu0 0
        %799 = vmatpush2.bf16.xpose.msra.mxu0 0
        %800 = vmatprep.subr.bf16.mxu0 0
        %801 = vmatpush2.bf16.xpose.msra.mxu0 0
        %802 = vmatprep.subr.bf16.mxu0 0
        %803 = vmatpush2.bf16.xpose.msra.mxu0 0
        %804 = vmatprep.subr.bf16.mxu0 0
        %805 = vmatpush2.bf16.xpose.msra.mxu0 0
        %806 = vmatprep.subr.bf16.mxu0 0
        %807 = vmatpush2.bf16.xpose.msra.mxu0 0
        %808 = vmatprep.subr.bf16.mxu0 0
        %809 = vmatpush2.bf16.xpose.msra.mxu0 0
        %810 = vmatprep.subr.bf16.mxu0 0
        %811 = vmatpush2.bf16.xpose.msra.mxu0 0
        %812 = vmatprep.subr.bf16.mxu0 0
        %813 = vmatpush2.bf16.xpose.msra.mxu0 0
        %814 = vmatprep.mubr.bf16.mxu0 0
        %815 = vmatmul.mubr.bf16.gmra.mxu0 %v777
        %v816 = vpop.f32.mrf.mxu0
        %v817 = vadd.f32 0.0, %v816
        %v818 = vpop.f32.mrf.mxu0
        %v819 = vpop.f32.mrf.mxu0
        %v820 = vpop.f32.mrf.mxu0
        %821 = vdwg.mxu0
        %v822 = vmul.f32 %v817, 0.35355338
        %v823 = vsel %vm579, %v822, -1e+30
        %v824 = vsel %vm466, %v823, -inf
        %825 = vmax.xlane.f32.xlu0 %v824
        %v826 = vpop.xlane.xlu0 %825
        %v827 = vsub.f32 %v823, %v826
        %v828 = vmul.f32 %v827, 1.442695
        %v829 = vpow.pop %v828
        %v830 = vsel %vm466, %v829, 0.0
        %831 = vadd.xlane.f32.xlu0 %v830
        %v832 = vpop.xlane.xlu0 %831
        %v833 = vrcp.pop %v832
        %v834 = vmul.f32 %v829, %v833
        %v835 = vpack.c.bf16 %v834, %v834
        %836 = vrot.lane.b32.xlu0 %v679, 56
        %v837 = vpop.permute.xlu0 %836
        %v839 = vsel %vm466, %v835, 0
        %v842 = vsel %vm470, %v837, 0
        %844 = vmatprep.subr.bf16.mxu0 0
        %845 = vmatpush1.bf16.msra.mxu0 0
        %846 = vmatprep.subr.bf16.mxu0 0
        %847 = vmatpush1.bf16.msra.mxu0 0
        %848 = vmatprep.subr.bf16.mxu0 0
        %849 = vmatpush1.bf16.msra.mxu0 0
        %850 = vmatprep.subr.bf16.mxu0 0
        %851 = vmatpush1.bf16.msra.mxu0 0
        %852 = vmatprep.subr.bf16.mxu0 0
        %853 = vmatpush1.bf16.msra.mxu0 0
        %854 = vmatprep.subr.bf16.mxu0 0
        %855 = vmatpush1.bf16.msra.mxu0 0
        %856 = vmatprep.subr.bf16.mxu0 0
        %857 = vmatpush1.bf16.msra.mxu0 0
        %858 = vmatprep.subr.bf16.mxu0 0
        %859 = vmatpush1.bf16.msra.mxu0 %v842
        %860 = vmatprep.subr.bf16.mxu0 0
        %861 = vmatpush2.bf16.msra.mxu0 0
        %862 = vmatprep.subr.bf16.mxu0 0
        %863 = vmatpush2.bf16.msra.mxu0 0
        %864 = vmatprep.subr.bf16.mxu0 0
        %865 = vmatpush2.bf16.msra.mxu0 0
        %866 = vmatprep.subr.bf16.mxu0 0
        %867 = vmatpush2.bf16.msra.mxu0 0
        %868 = vmatprep.subr.bf16.mxu0 0
        %869 = vmatpush2.bf16.msra.mxu0 0
        %870 = vmatprep.subr.bf16.mxu0 0
        %871 = vmatpush2.bf16.msra.mxu0 0
        %872 = vmatprep.subr.bf16.mxu0 0
        %873 = vmatpush2.bf16.msra.mxu0 0
        %874 = vmatprep.subr.bf16.mxu0 0
        %875 = vmatpush2.bf16.msra.mxu0 0
        %876 = vmatprep.mubr.bf16.mxu0 0
        %877 = vmatmul.mubr.bf16.gmra.mxu0 %v839
        %v878 = vpop.f32.mrf.mxu0
        %v879 = vadd.f32 0.0, %v878
        %v880 = vpop.f32.mrf.mxu0
        %v881 = vpop.f32.mrf.mxu0
        %v882 = vpop.f32.mrf.mxu0
        %883 = vdwg.mxu0
        %885 = vrot.lane.b32.xlu0 %v879, 8
        %v886 = vpop.permute.xlu0 %885
        %vm888 = vcmask 130112
        %889 = vst.msk [vmem:[#allocation2] sm:$0xff] %vm888, %v886
        %v890 = vld [vmem:[#allocation6] sm:$0xff]
        %v891 = vld [vmem:[#allocation8] sm:$0xff]
        %v892 = vmul.f32 %v574, %v890
        %893 = vrot.lane.b32.xlu0 %v583, 108
        %v894 = vpop.permute.xlu0 %893
        %896 = vrot.lane.b32.xlu0 %v574, 116
        %v897 = vpop.permute.xlu0 %896
        %v899 = vsel %vm592, %v894, %v897
        %901 = vrot.lane.b32.xlu0 %v891, 112
        %v902 = vpop.permute.xlu0 %901
        %v904 = vmul.f32 %v899, %v902
        %906 = vrot.lane.b32.xlu0 %v904, 16
        %v907 = vpop.permute.xlu0 %906
        %v909 = vadd.f32 %v892, %v907
        %911 = vrot.lane.b32.xlu0 %v890, 32
        %v912 = vpop.permute.xlu0 %911
        %v914 = vmul.f32 %v574, %v912
        %915 = vrot.lane.b32.xlu0 %v583, 76
        %v916 = vpop.permute.xlu0 %915
        %918 = vrot.lane.b32.xlu0 %v574, 84
        %v919 = vpop.permute.xlu0 %918
        %v921 = vsel %vm592, %v916, %v919
        %v922 = vmul.f32 %v921, %v902
        %924 = vrot.lane.b32.xlu0 %v922, 48
        %v925 = vpop.permute.xlu0 %924
        %v927 = vadd.f32 %v914, %v925
        %v928 = vpack.c.bf16 %v909, %v909
        %v929 = vpack.c.bf16 %v927, %v927
        %931 = vrot.lane.b32.xlu0 %v928, 112
        %v932 = vpop.permute.xlu0 %931
        %934 = vrot.lane.b32.xlu0 %v929, 80
        %v935 = vpop.permute.xlu0 %934
        %v937 = vsel %vm466, %v932, 0
        %v940 = vsel %vm466, %v935, 0
        %942 = vmatprep.subr.bf16.mxu0 0
        %943 = vmatpush1.bf16.xpose.msra.mxu0 0
        %944 = vmatprep.subr.bf16.mxu0 0
        %945 = vmatpush1.bf16.xpose.msra.mxu0 0
        %946 = vmatprep.subr.bf16.mxu0 0
        %947 = vmatpush1.bf16.xpose.msra.mxu0 0
        %948 = vmatprep.subr.bf16.mxu0 0
        %949 = vmatpush1.bf16.xpose.msra.mxu0 0
        %950 = vmatprep.subr.bf16.mxu0 0
        %951 = vmatpush1.bf16.xpose.msra.mxu0 0
        %952 = vmatprep.subr.bf16.mxu0 0
        %953 = vmatpush1.bf16.xpose.msra.mxu0 0
        %954 = vmatprep.subr.bf16.mxu0 0
        %955 = vmatpush1.bf16.xpose.msra.mxu0 0
        %956 = vmatprep.subr.bf16.mxu0 0
        %957 = vmatpush1.bf16.xpose.msra.mxu0 %v940
        %958 = vmatprep.subr.bf16.mxu0 0
        %959 = vmatpush2.bf16.xpose.msra.mxu0 0
        %960 = vmatprep.subr.bf16.mxu0 0
        %961 = vmatpush2.bf16.xpose.msra.mxu0 0
        %962 = vmatprep.subr.bf16.mxu0 0
        %963 = vmatpush2.bf16.xpose.msra.mxu0 0
        %964 = vmatprep.subr.bf16.mxu0 0
        %965 = vmatpush2.bf16.xpose.msra.mxu0 0
        %966 = vmatprep.subr.bf16.mxu0 0
        %967 = vmatpush2.bf16.xpose.msra.mxu0 0
        %968 = vmatprep.subr.bf16.mxu0 0
        %969 = vmatpush2.bf16.xpose.msra.mxu0 0
        %970 = vmatprep.subr.bf16.mxu0 0
        %971 = vmatpush2.bf16.xpose.msra.mxu0 0
        %972 = vmatprep.subr.bf16.mxu0 0
        %973 = vmatpush2.bf16.xpose.msra.mxu0 0
        %974 = vmatprep.mubr.bf16.mxu0 0
        %975 = vmatmul.mubr.bf16.gmra.mxu0 %v937
        %v976 = vpop.f32.mrf.mxu0
        %v977 = vadd.f32 0.0, %v976
        %v978 = vpop.f32.mrf.mxu0
        %v979 = vpop.f32.mrf.mxu0
        %v980 = vpop.f32.mrf.mxu0
        %981 = vdwg.mxu0
        %v982 = vmul.f32 %v977, 0.35355338
        %v983 = vsel %vm579, %v982, -1e+30
        %v984 = vsel %vm466, %v983, -inf
        %985 = vmax.xlane.f32.xlu0 %v984
        %v986 = vpop.xlane.xlu0 %985
        %v987 = vsub.f32 %v983, %v986
        %v988 = vmul.f32 %v987, 1.442695
        %v989 = vpow.pop %v988
        %v990 = vsel %vm466, %v989, 0.0
        %991 = vadd.xlane.f32.xlu0 %v990
        %v992 = vpop.xlane.xlu0 %991
        %v993 = vrcp.pop %v992
        %v994 = vmul.f32 %v989, %v993
        %v995 = vpack.c.bf16 %v994, %v994
        %996 = vrot.lane.b32.xlu0 %v679, 48
        %v997 = vpop.permute.xlu0 %996
        %v999 = vsel %vm466, %v995, 0
        %v1002 = vsel %vm470, %v997, 0
        %1004 = vmatprep.subr.bf16.mxu0 0
        %1005 = vmatpush1.bf16.msra.mxu0 0
        %1006 = vmatprep.subr.bf16.mxu0 0
        %1007 = vmatpush1.bf16.msra.mxu0 0
        %1008 = vmatprep.subr.bf16.mxu0 0
        %1009 = vmatpush1.bf16.msra.mxu0 0
        %1010 = vmatprep.subr.bf16.mxu0 0
        %1011 = vmatpush1.bf16.msra.mxu0 0
        %1012 = vmatprep.subr.bf16.mxu0 0
        %1013 = vmatpush1.bf16.msra.mxu0 0
        %1014 = vmatprep.subr.bf16.mxu0 0
        %1015 = vmatpush1.bf16.msra.mxu0 0
        %1016 = vmatprep.subr.bf16.mxu0 0
        %1017 = vmatpush1.bf16.msra.mxu0 0
        %1018 = vmatprep.subr.bf16.mxu0 0
        %1019 = vmatpush1.bf16.msra.mxu0 %v1002
        %1020 = vmatprep.subr.bf16.mxu0 0
        %1021 = vmatpush2.bf16.msra.mxu0 0
        %1022 = vmatprep.subr.bf16.mxu0 0
        %1023 = vmatpush2.bf16.msra.mxu0 0
        %1024 = vmatprep.subr.bf16.mxu0 0
        %1025 = vmatpush2.bf16.msra.mxu0 0
        %1026 = vmatprep.subr.bf16.mxu0 0
        %1027 = vmatpush2.bf16.msra.mxu0 0
        %1028 = vmatprep.subr.bf16.mxu0 0
        %1029 = vmatpush2.bf16.msra.mxu0 0
        %1030 = vmatprep.subr.bf16.mxu0 0
        %1031 = vmatpush2.bf16.msra.mxu0 0
        %1032 = vmatprep.subr.bf16.mxu0 0
        %1033 = vmatpush2.bf16.msra.mxu0 0
        %1034 = vmatprep.subr.bf16.mxu0 0
        %1035 = vmatpush2.bf16.msra.mxu0 0
        %1036 = vmatprep.mubr.bf16.mxu0 0
        %1037 = vmatmul.mubr.bf16.gmra.mxu0 %v999
        %v1038 = vpop.f32.mrf.mxu0
        %v1039 = vadd.f32 0.0, %v1038
        %v1040 = vpop.f32.mrf.mxu0
        %v1041 = vpop.f32.mrf.mxu0
        %v1042 = vpop.f32.mrf.mxu0
        %1043 = vdwg.mxu0
        %1045 = vrot.lane.b32.xlu0 %v1039, 16
        %v1046 = vpop.permute.xlu0 %1045
        %vm1048 = vcmask 195712
        %1049 = vst.msk [vmem:[#allocation2] sm:$0xff] %vm1048, %v1046
        %v1050 = vld [vmem:[#allocation6] sm:$0xff]
        %v1051 = vld [vmem:[#allocation8] sm:$0xff]
        %v1052 = vmul.f32 %v574, %v1050
        %1053 = vrot.lane.b32.xlu0 %v583, 100
        %v1054 = vpop.permute.xlu0 %1053
        %1056 = vrot.lane.b32.xlu0 %v574, 108
        %v1057 = vpop.permute.xlu0 %1056
        %v1059 = vsel %vm592, %v1054, %v1057
        %1061 = vrot.lane.b32.xlu0 %v1051, 104
        %v1062 = vpop.permute.xlu0 %1061
        %v1064 = vmul.f32 %v1059, %v1062
        %1066 = vrot.lane.b32.xlu0 %v1064, 24
        %v1067 = vpop.permute.xlu0 %1066
        %v1069 = vadd.f32 %v1052, %v1067
        %1071 = vrot.lane.b32.xlu0 %v1050, 32
        %v1072 = vpop.permute.xlu0 %1071
        %v1074 = vmul.f32 %v574, %v1072
        %1075 = vrot.lane.b32.xlu0 %v583, 68
        %v1076 = vpop.permute.xlu0 %1075
        %1078 = vrot.lane.b32.xlu0 %v574, 76
        %v1079 = vpop.permute.xlu0 %1078
        %v1081 = vsel %vm592, %v1076, %v1079
        %v1082 = vmul.f32 %v1081, %v1062
        %1084 = vrot.lane.b32.xlu0 %v1082, 56
        %v1085 = vpop.permute.xlu0 %1084
        %v1087 = vadd.f32 %v1074, %v1085
        %v1088 = vpack.c.bf16 %v1069, %v1069
        %v1089 = vpack.c.bf16 %v1087, %v1087
        %1091 = vrot.lane.b32.xlu0 %v1088, 104
        %v1092 = vpop.permute.xlu0 %1091
        %1094 = vrot.lane.b32.xlu0 %v1089, 72
        %v1095 = vpop.permute.xlu0 %1094
        %v1097 = vsel %vm466, %v1092, 0
        %v1100 = vsel %vm466, %v1095, 0
        %1102 = vmatprep.subr.bf16.mxu0 0
        %1103 = vmatpush1.bf16.xpose.msra.mxu0 0
        %1104 = vmatprep.subr.bf16.mxu0 0
        %1105 = vmatpush1.bf16.xpose.msra.mxu0 0
        %1106 = vmatprep.subr.bf16.mxu0 0
        %1107 = vmatpush1.bf16.xpose.msra.mxu0 0
        %1108 = vmatprep.subr.bf16.mxu0 0
        %1109 = vmatpush1.bf16.xpose.msra.mxu0 0
        %1110 = vmatprep.subr.bf16.mxu0 0
        %1111 = vmatpush1.bf16.xpose.msra.mxu0 0
        %1112 = vmatprep.subr.bf16.mxu0 0
        %1113 = vmatpush1.bf16.xpose.msra.mxu0 0
        %1114 = vmatprep.subr.bf16.mxu0 0
        %1115 = vmatpush1.bf16.xpose.msra.mxu0 0
        %1116 = vmatprep.subr.bf16.mxu0 0
        %1117 = vmatpush1.bf16.xpose.msra.mxu0 %v1100
        %1118 = vmatprep.subr.bf16.mxu0 0
        %1119 = vmatpush2.bf16.xpose.msra.mxu0 0
        %1120 = vmatprep.subr.bf16.mxu0 0
        %1121 = vmatpush2.bf16.xpose.msra.mxu0 0
        %1122 = vmatprep.subr.bf16.mxu0 0
        %1123 = vmatpush2.bf16.xpose.msra.mxu0 0
        %1124 = vmatprep.subr.bf16.mxu0 0
        %1125 = vmatpush2.bf16.xpose.msra.mxu0 0
        %1126 = vmatprep.subr.bf16.mxu0 0
        %1127 = vmatpush2.bf16.xpose.msra.mxu0 0
        %1128 = vmatprep.subr.bf16.mxu0 0
        %1129 = vmatpush2.bf16.xpose.msra.mxu0 0
        %1130 = vmatprep.subr.bf16.mxu0 0
        %1131 = vmatpush2.bf16.xpose.msra.mxu0 0
        %1132 = vmatprep.subr.bf16.mxu0 0
        %1133 = vmatpush2.bf16.xpose.msra.mxu0 0
        %1134 = vmatprep.mubr.bf16.mxu0 0
        %1135 = vmatmul.mubr.bf16.gmra.mxu0 %v1097
        %v1136 = vpop.f32.mrf.mxu0
        %v1137 = vadd.f32 0.0, %v1136
        %v1138 = vpop.f32.mrf.mxu0
        %v1139 = vpop.f32.mrf.mxu0
        %v1140 = vpop.f32.mrf.mxu0
        %1141 = vdwg.mxu0
        %v1142 = vmul.f32 %v1137, 0.35355338
        %v1143 = vsel %vm579, %v1142, -1e+30
        %v1144 = vsel %vm466, %v1143, -inf
        %1145 = vmax.xlane.f32.xlu0 %v1144
        %v1146 = vpop.xlane.xlu0 %1145
        %v1147 = vsub.f32 %v1143, %v1146
        %v1148 = vmul.f32 %v1147, 1.442695
        %v1149 = vpow.pop %v1148
        %v1150 = vsel %vm466, %v1149, 0.0
        %1151 = vadd.xlane.f32.xlu0 %v1150
        %v1152 = vpop.xlane.xlu0 %1151
        %v1153 = vrcp.pop %v1152
        %v1154 = vmul.f32 %v1149, %v1153
        %v1155 = vpack.c.bf16 %v1154, %v1154
        %1156 = vrot.lane.b32.xlu0 %v679, 40
        %v1157 = vpop.permute.xlu0 %1156
        %v1159 = vsel %vm466, %v1155, 0
        %v1162 = vsel %vm470, %v1157, 0
        %1164 = vmatprep.subr.bf16.mxu0 0
        %1165 = vmatpush1.bf16.msra.mxu0 0
        %1166 = vmatprep.subr.bf16.mxu0 0
        %1167 = vmatpush1.bf16.msra.mxu0 0
        %1168 = vmatprep.subr.bf16.mxu0 0
        %1169 = vmatpush1.bf16.msra.mxu0 0
        %1170 = vmatprep.subr.bf16.mxu0 0
        %1171 = vmatpush1.bf16.msra.mxu0 0
        %1172 = vmatprep.subr.bf16.mxu0 0
        %1173 = vmatpush1.bf16.msra.mxu0 0
        %1174 = vmatprep.subr.bf16.mxu0 0
        %1175 = vmatpush1.bf16.msra.mxu0 0
        %1176 = vmatprep.subr.bf16.mxu0 0
        %1177 = vmatpush1.bf16.msra.mxu0 0
        %1178 = vmatprep.subr.bf16.mxu0 0
        %1179 = vmatpush1.bf16.msra.mxu0 %v1162
        %1180 = vmatprep.subr.bf16.mxu0 0
        %1181 = vmatpush2.bf16.msra.mxu0 0
        %1182 = vmatprep.subr.bf16.mxu0 0
        %1183 = vmatpush2.bf16.msra.mxu0 0
        %1184 = vmatprep.subr.bf16.mxu0 0
        %1185 = vmatpush2.bf16.msra.mxu0 0
        %1186 = vmatprep.subr.bf16.mxu0 0
        %1187 = vmatpush2.bf16.msra.mxu0 0
        %1188 = vmatprep.subr.bf16.mxu0 0
        %1189 = vmatpush2.bf16.msra.mxu0 0
        %1190 = vmatprep.subr.bf16.mxu0 0
        %1191 = vmatpush2.bf16.msra.mxu0 0
        %1192 = vmatprep.subr.bf16.mxu0 0
        %1193 = vmatpush2.bf16.msra.mxu0 0
        %1194 = vmatprep.subr.bf16.mxu0 0
        %1195 = vmatpush2.bf16.msra.mxu0 0
        %1196 = vmatprep.mubr.bf16.mxu0 0
        %1197 = vmatmul.mubr.bf16.gmra.mxu0 %v1159
        %v1198 = vpop.f32.mrf.mxu0
        %v1199 = vadd.f32 0.0, %v1198
        %v1200 = vpop.f32.mrf.mxu0
        %v1201 = vpop.f32.mrf.mxu0
        %v1202 = vpop.f32.mrf.mxu0
        %1203 = vdwg.mxu0
        %1205 = vrot.lane.b32.xlu0 %v1199, 24
        %v1206 = vpop.permute.xlu0 %1205
        %vm1208 = vcmask 261312
        %1209 = vst.msk [vmem:[#allocation2] sm:$0xff] %vm1208, %v1206
        %v1210 = vld [vmem:[#allocation2] sm:$0xff]
        %v1211 = vpack.c.bf16 %v1210, %v1210
        %v1212 = vld [vmem:[%s7] sm:$0xf]
        %v1213 = vld [vmem:[%s7 + $0x4] sm:$0xf]
        %v1214 = vld [vmem:[%s7 + $0x8] sm:$0xf]
        %v1215 = vld [vmem:[%s7 + $0xc] sm:$0xf]
        %v1216 = vld [vmem:[%s8] sm:$0x1]
        %v1218 = vlaneseq
        %v1219 = vshrl.u32 %v1218, 7
        %v1220 = vsub.s32 0, %v1219
        %v1221 = vrot.slane %v1216, %v1220
        %v1227 = vunpack.c.l.b16 %v1212
        %v1228 = vunpack.c.l.b16 %v1213
        %v1229 = vunpack.c.l.b16 %v1214
        %v1230 = vunpack.c.l.b16 %v1215
        %v1231 = vpack.c.b16 %v1228, %v1227
        %v1232 = vpack.c.b16 %v1230, %v1229
        %v1236 = vsel %vm416, %v1211, 0
        %1238 = vmatprep.subr.bf16.mxu0 0
        %1239 = vmatpush1.bf16.msra.mxu0 0
        %1240 = vmatprep.subr.bf16.mxu0 0
        %1241 = vmatpush1.bf16.msra.mxu0 0
        %1242 = vmatprep.subr.bf16.mxu0 0
        %1243 = vmatpush1.bf16.msra.mxu0 0
        %1244 = vmatprep.subr.bf16.mxu0 0
        %1245 = vmatpush1.bf16.msra.mxu0 0
        %1246 = vmatprep.subr.bf16.mxu0 0
        %1247 = vmatpush1.bf16.msra.mxu0 0
        %1248 = vmatprep.subr.bf16.mxu0 0
        %1249 = vmatpush1.bf16.msra.mxu0 0
        %1250 = vmatprep.subr.bf16.mxu0 0
        %1251 = vmatpush1.bf16.msra.mxu0 %v1232
        %1252 = vmatprep.subr.bf16.mxu0 0
        %1253 = vmatpush1.bf16.msra.mxu0 %v1231
        %1254 = vmatprep.subr.bf16.mxu0 0
        %1255 = vmatpush2.bf16.msra.mxu0 0
        %1256 = vmatprep.subr.bf16.mxu0 0
        %1257 = vmatpush2.bf16.msra.mxu0 0
        %1258 = vmatprep.subr.bf16.mxu0 0
        %1259 = vmatpush2.bf16.msra.mxu0 0
        %1260 = vmatprep.subr.bf16.mxu0 0
        %1261 = vmatpush2.bf16.msra.mxu0 0
        %1262 = vmatprep.subr.bf16.mxu0 0
        %1263 = vmatpush2.bf16.msra.mxu0 0
        %1264 = vmatprep.subr.bf16.mxu0 0
        %1265 = vmatpush2.bf16.msra.mxu0 0
        %1266 = vmatprep.subr.bf16.mxu0 0
        %1267 = vmatpush2.bf16.msra.mxu0 0
        %1268 = vmatprep.subr.bf16.mxu0 0
        %1269 = vmatpush2.bf16.msra.mxu0 0
        %1270 = vmatprep.mubr.bf16.mxu0 0
        %1271 = vmatmul.mubr.bf16.gmra.mxu0 %v1236
        %v1272 = vpop.f32.mrf.mxu0
        %v1273 = vadd.f32 %v1221, %v1272
        %v1274 = vpop.f32.mrf.mxu0
        %v1275 = vpop.f32.mrf.mxu0
        %v1276 = vpop.f32.mrf.mxu0
        %1277 = vdwg.mxu0
        %1278 = vst.msk [vmem:[%s397] sm:$0xff] %vm416, %v1273
        %s1279 = sand.u32 %s230, 1
        %s1280 = scalar_lea.sflag [#allocation5], %s1279
        %s1281 = sand.u32 %s230, 1
        %s1282 = smul.addr %s1281, 8
        %s1283 = scalar_lea.vmem [#allocation12], %s1282
        // Predicated region
        $region77: #{tpu_custom_call.1} parent=55 // pred_check
          %p1284 = pneg %p240
        $region78: #{tpu_custom_call.1} parent=55 // pred_check_branch
          %1286 = sbr.rel (%p1284) target = $region80
        $region79: #{tpu_custom_call.1} parent=55 // pred_region
          %s1288 = ssub.s32 128, 128
          %1289 = vsyncadd %s1280, %s1288
          %s1290 = smul.addr %s28, 128
          %s1291 = scalar_lea.hbm %s9, %s1290
          %s1293 = sshll.u32 %s1283, 4
          %s1294 = int_to_ptr.vmem [resolvable:$true] %s1293
          %1296 = dma.vmem_to_hbm [thread:$0]  %s1294, 128, %s1291, %s1280
        $region80: #{tpu_custom_call.1} parent=55 // pred_fallthru
          _
      $region56: #{tpu_custom_call.1} parent=5 // pred_fallthru
        _
      %p1297 = scmp.le.s32.totalorder 2, %s23
      // Predicated region
      $region81: #{tpu_custom_call.1} parent=5 // pred_check
        %p1298 = pneg %p1297
      $region82: #{tpu_custom_call.1} parent=5 // pred_check_branch
        %1300 = sbr.rel (%p1298) target = $region84
      $region83: #{tpu_custom_call.1} parent=5 // pred_region
        %s1301 = ssub.s32 %s23, 2
        // Predicated region
        $region85: #{tpu_custom_call.1} parent=83 // pred_check
          %p1302 = pneg %p246
        $region86: #{tpu_custom_call.1} parent=83 // pred_check_branch
          %1304 = sbr.rel (%p1302) target = $region88
        $region87: #{tpu_custom_call.1} parent=83 // pred_region
          %s1305 = sand.u32 %s231, 1
          %s1306 = scalar_lea.sflag [#allocation5], %s1305
          %s1307 = sand.u32 %s231, 1
          %s1308 = smul.addr %s1307, 8
          %s1309 = scalar_lea.vmem [#allocation12], %s1308
          %1310 = dma.done %s1306, 128
        $region88: #{tpu_custom_call.1} parent=83 // pred_fallthru
          _
      $region84: #{tpu_custom_call.1} parent=5 // pred_fallthru
        _
    $region6: #{tpu_custom_call.1} parent=1 // loop_footer
      %s27 = sadd.s32 1, %s23
    $region7: #{tpu_custom_call.1} parent=1 // loop_footer_branch
      %22 = sbr.rel target = $region3
    $region8: #{tpu_custom_call.1} parent=1 // loop_exit
      _
    %1311 = vsyncpa [#allocation4], 1
    %s1312 = scalar_lea.sflag [#allocation4], 1
    %1313 = vsyncpa %s1312, 1
    %1314 = vsyncpa [#allocation7], 1
    %1315 = vsyncpa [#allocation10], 1
    %1316 = vsyncpa [#allocation5], 1
    %s1317 = scalar_lea.sflag [#allocation5], 1
    %1318 = vsyncpa %s1317, 1

</llo_original>
